<compile_context>
chip_gen: v6e
topology: v6e:2x2x1
jax: 0.10.0
libtpu: 0.0.40
codegen_flags: <defaults>
</compile_context>

<pallas_src>
import functools

import jax
import jax.numpy as jnp
from jax import lax
from jax.experimental import pallas as pl
from jax.experimental.pallas import tpu as pltpu


def xca_kernel(*refs, fuse_qk, compute_dtype, approx_recip):
    if fuse_qk:
        (x_ref, wqk_ref, wv_ref, wp_ref, bp_ref, temp_ref, mask_ref,
         o_ref, acc_ref, sqq_ref, sqk_ref, m_ref) = refs
    else:
        (x_ref, wq_ref, wk_ref, wv_ref, wp_ref, bp_ref, temp_ref, mask_ref,
         o_ref, acc_ref, sqq_ref, sqk_ref, m_ref) = refs

    cd = compute_dtype
    Bb, tn, C = x_ref.shape
    phase = pl.program_id(1)
    n_idx = pl.program_id(2)
    eps2 = jnp.float32(1e-24)          # (F.normalize eps = 1e-12) ** 2

    # ---- Phase 0: accumulate cross-covariance and per-channel column norms ----
    @pl.when(phase == 0)
    def _accumulate():
        @pl.when(n_idx == 0)
        def _init():
            acc_ref[...] = jnp.zeros_like(acc_ref)
            sqq_ref[...] = jnp.zeros_like(sqq_ref)
            sqk_ref[...] = jnp.zeros_like(sqk_ref)

        ones_col = jnp.ones((tn, 1), jnp.float32)
        for b in range(Bb):                      # per-b, results go straight to refs
            xb = x_ref[b].astype(cd)             # (tn, C): cast in-kernel, not on host
            if fuse_qk:                          # C % 128 == 0: one fused q|k matmul
                qk = jnp.dot(xb, wqk_ref[...], preferred_element_type=jnp.float32)
                q, k = qk[:, :C], qk[:, C:]      # lane-aligned static slices
            else:
                q = jnp.dot(xb, wq_ref[...], preferred_element_type=jnp.float32)
                k = jnp.dot(xb, wk_ref[...], preferred_element_type=jnp.float32)
            # G[i, j] += sum_n q[n, i] * k[n, j]  (full CxC; heads masked later)
            acc_ref[b] += lax.dot_general(
                q.astype(cd), k.astype(cd), (((0,), (0,)), ((), ())),
                preferred_element_type=jnp.float32)
            # Column sums of squares: q in (C, 1) row layout (needed for the
            # per-row rescale at finalize), k in (1, C) lane layout.
            sqq_ref[b] += lax.dot_general(
                q * q, ones_col, (((0,), (0,)), ((), ())),
                preferred_element_type=jnp.float32)
            sqk_ref[b] += jnp.sum(k * k, axis=0, keepdims=True)

    # ---- Phase 1: finalize attention once, then stream out = x @ M + b --------
    @pl.when(phase == 1)
    def _produce():
        @pl.when(n_idx == 0)
        def _finalize():
            temp = temp_ref[...]                 # (1, C) per-head temperature lanes
            mask = mask_ref[...]                 # (C, C) additive block-diag mask
            for b in range(Bb):
                inv_q = lax.rsqrt(jnp.maximum(sqq_ref[b], eps2))   # (C, 1)
                inv_k = lax.rsqrt(jnp.maximum(sqk_ref[b], eps2))   # (1, C)
                logits = acc_ref[b] * inv_q * (inv_k * temp) + mask
                logits = logits - jnp.max(logits, axis=-1, keepdims=True)
                p = jnp.exp(logits)              # masked entries underflow to 0 (f32)
                attn = p * pl.reciprocal(jnp.sum(p, axis=-1, keepdims=True),
                                         approx=approx_recip)
                # Fold attention + output projection:  M = Wv @ attn^T @ Wp
                t1 = lax.dot_general(wv_ref[...], attn.astype(cd),
                                     (((1,), (1,)), ((), ())),
                                     preferred_element_type=jnp.float32)
                m_ref[b] = jnp.dot(t1.astype(cd), wp_ref[...],
                                   preferred_element_type=jnp.float32).astype(cd)

        bp = bp_ref[...]                         # (1, C) f32 bias
        for b in range(Bb):
            xb = x_ref[b].astype(cd)             # (tn, C)
            yb = jnp.dot(xb, m_ref[b], preferred_element_type=jnp.float32) + bp
            o_ref[b] = yb.astype(o_ref.dtype)    # store per-b, no concat / y slab


def xca_forward(x, w_qkv, w_proj, b_proj, temperature, num_heads, *,
                compute_dtype=jnp.bfloat16, out_dtype=None,
                block_b=None, block_n=None, approx_recip=True):
    """x: (B, N, C); w_qkv: (C, 3C) transposed weight; w_proj: (C, C); b_proj: (C,)/(1,C)."""
    B, N, C = x.shape
    assert C % num_heads == 0
    d = C // num_heads
    cd = jnp.dtype(compute_dtype)
    od = jnp.dtype(cd if out_dtype is None else out_dtype)

    fuse_qk = (C % 128 == 0)

    # Host-side weight prep (tiny, one-off): split/fuse qkv, mask, temperature lanes.
    w_q, w_k, w_v = w_qkv[:, :C], w_qkv[:, C:2 * C], w_qkv[:, 2 * C:]
    if fuse_qk:
        qk_args = (jnp.concatenate([w_q, w_k], axis=1).astype(cd),)
    else:
        qk_args = (w_q.astype(cd), w_k.astype(cd))
    w_v = w_v.astype(cd)
    w_p = w_proj.astype(cd)
    b_p = b_proj.reshape(1, C).astype(jnp.float32)
    temp_lane = jnp.repeat(temperature.reshape(-1).astype(jnp.float32), d).reshape(1, C)
    ch = jnp.arange(C) // d
    mask = jnp.where(ch[:, None] == ch[None, :], 0.0, -1e30).astype(jnp.float32)

    # Per-generation VMEM budget: ~48 MiB on v7x (64 MiB parts), ~96 MiB on v5e/v6e.
    try:
        vmem_cap = int(pltpu.get_tpu_info().vmem_capacity_bytes)
    except Exception:
        vmem_cap = 128 << 20
    budget = max(min(vmem_cap * 3 // 4, vmem_cap - (16 << 20)), 16 << 20)

    xb_, ob_, cb_ = jnp.dtype(x.dtype).itemsize, od.itemsize, cd.itemsize

    def est_vmem(bb, tn):
        io = 2 * bb * tn * C * (xb_ + ob_)                       # double-buffered x / out blocks
        w = 2 * (4 * C * C * cb_ + C * C * 4 + 4 * C * 4)        # qk|q,k + v + p, mask, bias, temp
        scr = bb * (C * C * (4 + cb_) + (C * 128 + 8 * C) * 4)   # G + M + padded norm accumulators
        live = 6 * tn * C * 4 * min(bb, 2) + 6 * C * C * 4       # in-flight f32 values per b
        return io + w + scr + live

    def _valid_bn(t):
        return N % t == 0 and (t == N or t % 8 == 0)

    # N tiling: single pass when it fits the budget, else largest mult-of-8 divisor.
    if block_n is not None:
        bn = next((t for t in range(min(block_n, N), 0, -1) if _valid_bn(t)), N)
    else:
        bn = N
        if est_vmem(1, N) > budget:
            bn = next((t for t in range(N - 1, 0, -1)
                       if _valid_bn(t) and est_vmem(1, t) <= budget), N)

    # Batch blocking: divide B, keep >= 2 grid steps on the parallel axis (v7x has
    # two TensorCores), bound the in-kernel unroll, stay inside the VMEM budget.
    bb_cap = max(1, min(B if B == 1 else B // 2, 16))
    if block_b is not None:
        bb = next((t for t in range(min(block_b, B), 0, -1) if B % t == 0), 1)
    else:
        bb = 1
        for cand in range(bb_cap, 0, -1):
            if B % cand == 0 and est_vmem(cand, bn) <= budget:
                bb = cand
                break

    vmem_limit = int(min(max(est_vmem(bb, bn) + (4 << 20), 32 << 20), vmem_cap))
    grid = (B // bb, 2, N // bn)

    const = lambda i, j, k: (0, 0)
    in_specs = [pl.BlockSpec((bb, bn, C), lambda i, j, k: (i, k, 0))]   # x (native dtype)
    in_specs += [pl.BlockSpec(a.shape, const) for a in qk_args]         # w_qk  |  w_q, w_k
    in_specs += [
        pl.BlockSpec((C, C), const),        # w_v
        pl.BlockSpec((C, C), const),        # w_proj
        pl.BlockSpec((1, C), const),        # proj bias (f32)
        pl.BlockSpec((1, C), const),        # per-head temperature lanes (f32)
        pl.BlockSpec((C, C), const),        # additive block-diagonal mask (f32)
    ]
    # During phase 0 the output stays parked on block (i, 0) and is never written;
    # phase 1 then overwrites every block exactly once (consecutive visits only).
    out_specs = pl.BlockSpec((bb, bn, C), lambda i, j, k: (i, j * k, 0))

    kernel = functools.partial(xca_kernel, fuse_qk=fuse_qk, compute_dtype=cd,
                               approx_recip=approx_recip)
    return pl.pallas_call(
        kernel,
        out_shape=jax.ShapeDtypeStruct((B, N, C), od),
        grid=grid,
        in_specs=in_specs,
        out_specs=out_specs,
        scratch_shapes=[
            pltpu.VMEM((bb, C, C), jnp.float32),   # G: cross-covariance accumulator
            pltpu.VMEM((bb, C, 1), jnp.float32),   # sum_n q^2 (row layout)
            pltpu.VMEM((bb, 1, C), jnp.float32),   # sum_n k^2 (lane layout)
            pltpu.VMEM((bb, C, C), cd),            # M = Wv @ attn^T @ Wp
        ],
        compiler_params=pltpu.CompilerParams(
            dimension_semantics=("parallel", "arbitrary", "arbitrary"),
            vmem_limit_bytes=vmem_limit),
    )(x, *qk_args, w_v, w_p, b_p, temp_lane, mask)


def xca_reference(x, w_qkv, w_proj, b_proj, temperature, num_heads):
    """Pure-JAX reference matching the PyTorch forward exactly."""
    B, N, C = x.shape
    d = C // num_heads
    with jax.default_matmul_precision("highest"):
        qkv = x @ w_qkv                                           # (B, N, 3C)
        qkv = qkv.reshape(B, N, 3, num_heads, d).transpose(2, 0, 3, 1, 4)
        q, k, v = qkv[0], qkv[1], qkv[2]                          # (B, H, N, d)
        q = jnp.swapaxes(q, -2, -1)                               # (B, H, d, N)
        k = jnp.swapaxes(k, -2, -1)
        v = jnp.swapaxes(v, -2, -1)
        q = q / jnp.maximum(jnp.linalg.norm(q, axis=-1, keepdims=True), 1e-12)
        k = k / jnp.maximum(jnp.linalg.norm(k, axis=-1, keepdims=True), 1e-12)
        attn = (q @ jnp.swapaxes(k, -2, -1)) * temperature.reshape(1, num_heads, 1, 1)
        attn = jax.nn.softmax(attn, axis=-1)
        out = (attn @ v).transpose(0, 3, 1, 2).reshape(B, N, C)
        return out @ w_proj + b_proj.reshape(1, 1, C)


if __name__ == "__main__":
    def make_inputs(key, B, N, C, H):
        kx, kq, kp, kb, kt = jax.random.split(key, 5)
        x = jax.random.normal(kx, (B, N, C), jnp.float32)
        w_qkv = jax.random.normal(kq, (C, 3 * C), jnp.float32) * 0.05
        w_proj = jax.random.normal(kp, (C, C), jnp.float32) * 0.05
        b_proj = jax.random.normal(kb, (1, C), jnp.float32) * 0.05
        temperature = jax.random.uniform(kt, (H,), jnp.float32, minval=0.5, maxval=1.5)
        return x, w_qkv, w_proj, b_proj, temperature

    key = jax.random.PRNGKey(0)
    k1, k2 = jax.random.split(key)

    # Case 1: dim=32, heads=8 (head_dim=4) -- split-qk path, single N tile.
    B, N, C, H = 2, 8, 32, 8
    args = make_inputs(k1, B, N, C, H)
    ref = xca_reference(*args, H)

    out_f32 = jax.block_until_ready(
        xca_forward(*args, H, compute_dtype=jnp.float32, approx_recip=False))
    assert out_f32.shape == (B, N, C) and out_f32.dtype == jnp.float32
    assert jnp.allclose(out_f32, ref, atol=1e-3, rtol=1e-3), "f32 kernel mismatch"

    out_bf16 = jax.block_until_ready(
        xca_forward(*args, H, compute_dtype=jnp.bfloat16, approx_recip=True))
    assert out_bf16.shape == (B, N, C) and out_bf16.dtype == jnp.bfloat16
    assert jnp.allclose(out_bf16.astype(jnp.float32), ref, atol=3e-2, rtol=3e-2), \
        "bf16 kernel mismatch"

    # Case 2: dim=128, heads=4 -- fused q|k matmul (C % 128 == 0), forced N tiling
    # (two 8-token tiles), batch blocking (block_b = 2) and a bf16 output.
    B, N, C, H = 4, 16, 128, 4
    args = make_inputs(k2, B, N, C, H)
    ref = xca_reference(*args, H)
    out2 = jax.block_until_ready(
        xca_forward(*args, H, compute_dtype=jnp.bfloat16, out_dtype=jnp.bfloat16,
                    block_n=8, approx_recip=True))
    assert out2.shape == (B, N, C) and out2.dtype == jnp.bfloat16
    assert jnp.allclose(out2.astype(jnp.float32), ref, atol=3e-2, rtol=3e-2), \
        "tiled / fused-qk kernel mismatch"

    print("KERNEL_OK")
</pallas_src>

<mosaic_0001>
module attributes {stable_mosaic.version = 11 : i64} {
  func.func @xca_kernel(%arg0: i32, %arg1: i32, %arg2: i32, %arg3: memref<1x8x32xf32, #tpu.memory_space<vmem>>, %arg4: memref<32x32xf32, #tpu.memory_space<vmem>>, %arg5: memref<32x32xf32, #tpu.memory_space<vmem>>, %arg6: memref<32x32xf32, #tpu.memory_space<vmem>>, %arg7: memref<32x32xf32, #tpu.memory_space<vmem>>, %arg8: memref<1x32xf32, #tpu.memory_space<vmem>>, %arg9: memref<1x32xf32, #tpu.memory_space<vmem>>, %arg10: memref<32x32xf32, #tpu.memory_space<vmem>>, %arg11: memref<1x8x32xf32, #tpu.memory_space<vmem>>, %arg12: memref<1x32x32xf32, #tpu.memory_space<vmem>>, %arg13: memref<1x32x1xf32, #tpu.memory_space<vmem>>, %arg14: memref<1x1x32xf32, #tpu.memory_space<vmem>>, %arg15: memref<1x32x32xf32, #tpu.memory_space<vmem>>) attributes {dimension_semantics = [#tpu.dimension_semantics<parallel>, #tpu.dimension_semantics<arbitrary>, #tpu.dimension_semantics<arbitrary>], iteration_bounds = array<i64: 2, 2, 1>, scalar_prefetch = 0 : i64, scratch_operands = 4 : i64, tpu.core_type = #tpu.core_type<tc>, window_params = [{transform_indices = @transform_0, window_bounds = array<i64: 1, 8, 32>}, {pipeline_mode = #tpu.pipeline_mode<synchronous>, transform_indices = @transform_1, window_bounds = array<i64: 32, 32>}, {pipeline_mode = #tpu.pipeline_mode<synchronous>, transform_indices = @transform_2, window_bounds = array<i64: 32, 32>}, {pipeline_mode = #tpu.pipeline_mode<synchronous>, transform_indices = @transform_3, window_bounds = array<i64: 32, 32>}, {pipeline_mode = #tpu.pipeline_mode<synchronous>, transform_indices = @transform_4, window_bounds = array<i64: 32, 32>}, {pipeline_mode = #tpu.pipeline_mode<synchronous>, transform_indices = @transform_5, window_bounds = array<i64: 1, 32>}, {pipeline_mode = #tpu.pipeline_mode<synchronous>, transform_indices = @transform_6, window_bounds = array<i64: 1, 32>}, {pipeline_mode = #tpu.pipeline_mode<synchronous>, transform_indices = @transform_7, window_bounds = array<i64: 32, 32>}, {transform_indices = @transform_8, window_bounds = array<i64: 1, 8, 32>}]} {
    %c0_i32 = arith.constant 0 : i32
    %0 = arith.cmpi eq, %arg1, %c0_i32 : i32
    %1 = arith.extui %0 : i1 to i32
    %c0_i32_0 = arith.constant 0 : i32
    %2 = arith.cmpi ne, %1, %c0_i32_0 : i32
    scf.if %2 {
      %c0_i32_2 = arith.constant 0 : i32
      %6 = arith.cmpi eq, %arg2, %c0_i32_2 : i32
      %7 = arith.extui %6 : i1 to i32
      %c0_i32_3 = arith.constant 0 : i32
      %8 = arith.cmpi ne, %7, %c0_i32_3 : i32
      scf.if %8 {
        %cst_34 = arith.constant 0.000000e+00 : f32
        %40 = vector.broadcast %cst_34 : f32 to vector<1x32x32xf32>
        %c0_35 = arith.constant 0 : index
        %c0_36 = arith.constant 0 : index
        %c0_37 = arith.constant 0 : index
        %41 = vector.load %arg12[%c0_35, %c0_36, %c0_37] : memref<1x32x32xf32, #tpu.memory_space<vmem>>, vector<1x32x32xf32>
        tpu.vector_store %arg12[%c0_35, %c0_36, %c0_37], %40 {strides = array<i32>} : memref<1x32x32xf32, #tpu.memory_space<vmem>>, vector<1x32x32xf32>,
        %cst_38 = arith.constant 0.000000e+00 : f32
        %42 = vector.broadcast %cst_38 : f32 to vector<1x32x1xf32>
        %c0_39 = arith.constant 0 : index
        %c0_40 = arith.constant 0 : index
        %c0_41 = arith.constant 0 : index
        %43 = vector.load %arg13[%c0_39, %c0_40, %c0_41] : memref<1x32x1xf32, #tpu.memory_space<vmem>>, vector<1x32x1xf32>
        tpu.vector_store %arg13[%c0_39, %c0_40, %c0_41], %42 {strides = array<i32>} : memref<1x32x1xf32, #tpu.memory_space<vmem>>, vector<1x32x1xf32>,
        %cst_42 = arith.constant 0.000000e+00 : f32
        %44 = vector.broadcast %cst_42 : f32 to vector<1x1x32xf32>
        %c0_43 = arith.constant 0 : index
        %c0_44 = arith.constant 0 : index
        %c0_45 = arith.constant 0 : index
        %45 = vector.load %arg14[%c0_43, %c0_44, %c0_45] : memref<1x1x32xf32, #tpu.memory_space<vmem>>, vector<1x1x32xf32>
        tpu.vector_store %arg14[%c0_43, %c0_44, %c0_45], %44 {strides = array<i32>} : memref<1x1x32xf32, #tpu.memory_space<vmem>>, vector<1x1x32xf32>,
      } else {
      }
      %cst_4 = arith.constant 1.000000e+00 : f32
      %9 = vector.broadcast %cst_4 : f32 to vector<8x1xf32>
      %c0 = arith.constant 0 : index
      %c0_5 = arith.constant 0 : index
      %c0_6 = arith.constant 0 : index
      %10 = vector.load %arg3[%c0, %c0_5, %c0_6] : memref<1x8x32xf32, #tpu.memory_space<vmem>>, vector<1x8x32xf32>
      %11 = vector.shape_cast %10 : vector<1x8x32xf32> to vector<8x32xf32>
      %c0_7 = arith.constant 0 : index
      %c0_8 = arith.constant 0 : index
      %12 = vector.load %arg4[%c0_7, %c0_8] : memref<32x32xf32, #tpu.memory_space<vmem>>, vector<32x32xf32>
      %cst_9 = arith.constant dense<0.000000e+00> : vector<8x32xf32>
      %13 = tpu.matmul %11, %12, %cst_9 {dimension_numbers = #tpu.dot_dimension_numbers<[1], [0], [0], [1], [0, 0, 1, 1], [], []>} : vector<8x32xf32>, vector<32x32xf32>, vector<8x32xf32> -> vector<8x32xf32>
      %c0_10 = arith.constant 0 : index
      %c0_11 = arith.constant 0 : index
      %14 = vector.load %arg5[%c0_10, %c0_11] : memref<32x32xf32, #tpu.memory_space<vmem>>, vector<32x32xf32>
      %cst_12 = arith.constant dense<0.000000e+00> : vector<8x32xf32>
      %15 = tpu.matmul %11, %14, %cst_12 {dimension_numbers = #tpu.dot_dimension_numbers<[1], [0], [0], [1], [0, 0, 1, 1], [], []>} : vector<8x32xf32>, vector<32x32xf32>, vector<8x32xf32> -> vector<8x32xf32>
      %c0_13 = arith.constant 0 : index
      %c0_14 = arith.constant 0 : index
      %c0_15 = arith.constant 0 : index
      %16 = vector.load %arg12[%c0_13, %c0_14, %c0_15] : memref<1x32x32xf32, #tpu.memory_space<vmem>>, vector<1x32x32xf32>
      %17 = vector.shape_cast %16 : vector<1x32x32xf32> to vector<32x32xf32>
      %cst_16 = arith.constant dense<0.000000e+00> : vector<32x32xf32>
      %18 = tpu.matmul %13, %15, %cst_16 {dimension_numbers = #tpu.dot_dimension_numbers<[0], [0], [1], [1], [0, 1, 1, 1], [], []>} : vector<8x32xf32>, vector<8x32xf32>, vector<32x32xf32> -> vector<32x32xf32>
      %19 = arith.addf %17, %18 : vector<32x32xf32>
      %c0_17 = arith.constant 0 : index
      %c0_18 = arith.constant 0 : index
      %c0_19 = arith.constant 0 : index
      %20 = vector.load %arg12[%c0_17, %c0_18, %c0_19] : memref<1x32x32xf32, #tpu.memory_space<vmem>>, vector<1x32x32xf32>
      %21 = vector.shape_cast %20 : vector<1x32x32xf32> to vector<32x32xf32>
      %22 = vector.shape_cast %19 : vector<32x32xf32> to vector<1x32x32xf32>
      tpu.vector_store %arg12[%c0_17, %c0_18, %c0_19], %22 {strides = array<i32>} : memref<1x32x32xf32, #tpu.memory_space<vmem>>, vector<1x32x32xf32>,
      %c0_20 = arith.constant 0 : index
      %c0_21 = arith.constant 0 : index
      %c0_22 = arith.constant 0 : index
      %23 = vector.load %arg13[%c0_20, %c0_21, %c0_22] : memref<1x32x1xf32, #tpu.memory_space<vmem>>, vector<1x32x1xf32>
      %24 = vector.shape_cast %23 : vector<1x32x1xf32> to vector<32x1xf32>
      %25 = arith.mulf %13, %13 : vector<8x32xf32>
      %cst_23 = arith.constant dense<0.000000e+00> : vector<32x1xf32>
      %26 = tpu.matmul %25, %9, %cst_23 {dimension_numbers = #tpu.dot_dimension_numbers<[0], [0], [1], [1], [0, 1, 1, 1], [], []>} : vector<8x32xf32>, vector<8x1xf32>, vector<32x1xf32> -> vector<32x1xf32>
      %27 = arith.addf %24, %26 : vector<32x1xf32>
      %c0_24 = arith.constant 0 : index
      %c0_25 = arith.constant 0 : index
      %c0_26 = arith.constant 0 : index
      %28 = vector.load %arg13[%c0_24, %c0_25, %c0_26] : memref<1x32x1xf32, #tpu.memory_space<vmem>>, vector<1x32x1xf32>
      %29 = vector.shape_cast %28 : vector<1x32x1xf32> to vector<32x1xf32>
      %30 = vector.shape_cast %27 : vector<32x1xf32> to vector<1x32x1xf32>
      tpu.vector_store %arg13[%c0_24, %c0_25, %c0_26], %30 {strides = array<i32>} : memref<1x32x1xf32, #tpu.memory_space<vmem>>, vector<1x32x1xf32>,
      %c0_27 = arith.constant 0 : index
      %c0_28 = arith.constant 0 : index
      %c0_29 = arith.constant 0 : index
      %31 = vector.load %arg14[%c0_27, %c0_28, %c0_29] : memref<1x1x32xf32, #tpu.memory_space<vmem>>, vector<1x1x32xf32>
      %32 = vector.shape_cast %31 : vector<1x1x32xf32> to vector<1x32xf32>
      %33 = arith.mulf %15, %15 : vector<8x32xf32>
      %cst_30 = arith.constant dense<0.000000e+00> : vector<32xf32>
      %34 = vector.multi_reduction <add>, %33, %cst_30 [0] : vector<8x32xf32> to vector<32xf32>
      %35 = vector.shape_cast %34 : vector<32xf32> to vector<1x32xf32>
      %36 = arith.addf %32, %35 : vector<1x32xf32>
      %c0_31 = arith.constant 0 : index
      %c0_32 = arith.constant 0 : index
      %c0_33 = arith.constant 0 : index
      %37 = vector.load %arg14[%c0_31, %c0_32, %c0_33] : memref<1x1x32xf32, #tpu.memory_space<vmem>>, vector<1x1x32xf32>
      %38 = vector.shape_cast %37 : vector<1x1x32xf32> to vector<1x32xf32>
      %39 = vector.shape_cast %36 : vector<1x32xf32> to vector<1x1x32xf32>
      tpu.vector_store %arg14[%c0_31, %c0_32, %c0_33], %39 {strides = array<i32>} : memref<1x1x32xf32, #tpu.memory_space<vmem>>, vector<1x1x32xf32>,
    } else {
    }
    %c1_i32 = arith.constant 1 : i32
    %3 = arith.cmpi eq, %arg1, %c1_i32 : i32
    %4 = arith.extui %3 : i1 to i32
    %cst = arith.constant 1.000000e-24 : f32
    %c0_i32_1 = arith.constant 0 : i32
    %5 = arith.cmpi ne, %4, %c0_i32_1 : i32
    scf.if %5 {
      %c0_i32_2 = arith.constant 0 : i32
      %6 = arith.cmpi eq, %arg2, %c0_i32_2 : i32
      %7 = arith.extui %6 : i1 to i32
      %c0_i32_3 = arith.constant 0 : i32
      %8 = arith.cmpi ne, %7, %c0_i32_3 : i32
      scf.if %8 {
        %c0_15 = arith.constant 0 : index
        %c0_16 = arith.constant 0 : index
        %20 = vector.load %arg9[%c0_15, %c0_16] : memref<1x32xf32, #tpu.memory_space<vmem>>, vector<1x32xf32>
        %c0_17 = arith.constant 0 : index
        %c0_18 = arith.constant 0 : index
        %21 = vector.load %arg10[%c0_17, %c0_18] : memref<32x32xf32, #tpu.memory_space<vmem>>, vector<32x32xf32>
        %c0_19 = arith.constant 0 : index
        %c0_20 = arith.constant 0 : index
        %c0_21 = arith.constant 0 : index
        %22 = vector.load %arg13[%c0_19, %c0_20, %c0_21] : memref<1x32x1xf32, #tpu.memory_space<vmem>>, vector<1x32x1xf32>
        %23 = vector.shape_cast %22 : vector<1x32x1xf32> to vector<32x1xf32>
        %24 = vector.broadcast %cst : f32 to vector<32x1xf32>
        %25 = arith.maximumf %23, %24 : vector<32x1xf32>
        %26 = math.rsqrt %25 : vector<32x1xf32>
        %c0_22 = arith.constant 0 : index
        %c0_23 = arith.constant 0 : index
        %c0_24 = arith.constant 0 : index
        %27 = vector.load %arg14[%c0_22, %c0_23, %c0_24] : memref<1x1x32xf32, #tpu.memory_space<vmem>>, vector<1x1x32xf32>
        %28 = vector.shape_cast %27 : vector<1x1x32xf32> to vector<1x32xf32>
        %29 = vector.broadcast %cst : f32 to vector<1x32xf32>
        %30 = arith.maximumf %28, %29 : vector<1x32xf32>
        %31 = math.rsqrt %30 : vector<1x32xf32>
        %c0_25 = arith.constant 0 : index
        %c0_26 = arith.constant 0 : index
        %c0_27 = arith.constant 0 : index
        %32 = vector.load %arg12[%c0_25, %c0_26, %c0_27] : memref<1x32x32xf32, #tpu.memory_space<vmem>>, vector<1x32x32xf32>
        %33 = vector.shape_cast %32 : vector<1x32x32xf32> to vector<32x32xf32>
        %34 = vector.broadcast %26 : vector<32x1xf32> to vector<32x32xf32>
        %35 = arith.mulf %33, %34 : vector<32x32xf32>
        %36 = arith.mulf %31, %20 : vector<1x32xf32>
        %37 = vector.broadcast %36 : vector<1x32xf32> to vector<32x32xf32>
        %38 = arith.mulf %35, %37 : vector<32x32xf32>
        %39 = arith.addf %38, %21 : vector<32x32xf32>
        %cst_28 = arith.constant dense<0xFF800000> : vector<32xf32>
        %40 = vector.multi_reduction <maximumf>, %39, %cst_28 [1] : vector<32x32xf32> to vector<32xf32>
        %41 = vector.shape_cast %40 : vector<32xf32> to vector<32x1xf32>
        %42 = vector.broadcast %41 : vector<32x1xf32> to vector<32x32xf32>
        %43 = arith.subf %39, %42 : vector<32x32xf32>
        %44 = math.exp %43 : vector<32x32xf32>
        %cst_29 = arith.constant dense<0.000000e+00> : vector<32xf32>
        %45 = vector.multi_reduction <add>, %44, %cst_29 [1] : vector<32x32xf32> to vector<32xf32>
        %46 = vector.shape_cast %45 : vector<32xf32> to vector<32x1xf32>
        %47 = tpu.reciprocal %46 : vector<32x1xf32> -> vector<32x1xf32>
        %48 = vector.broadcast %47 : vector<32x1xf32> to vector<32x32xf32>
        %49 = arith.mulf %44, %48 : vector<32x32xf32>
        %c0_30 = arith.constant 0 : index
        %c0_31 = arith.constant 0 : index
        %50 = vector.load %arg6[%c0_30, %c0_31] : memref<32x32xf32, #tpu.memory_space<vmem>>, vector<32x32xf32>
        %cst_32 = arith.constant dense<0.000000e+00> : vector<32x32xf32>
        %51 = tpu.matmul %50, %49, %cst_32 {dimension_numbers = #tpu.dot_dimension_numbers<[1], [1], [0], [0], [0, 0, 1, 0], [], []>} : vector<32x32xf32>, vector<32x32xf32>, vector<32x32xf32> -> vector<32x32xf32>
        %c0_33 = arith.constant 0 : index
        %c0_34 = arith.constant 0 : index
        %52 = vector.load %arg7[%c0_33, %c0_34] : memref<32x32xf32, #tpu.memory_space<vmem>>, vector<32x32xf32>
        %cst_35 = arith.constant dense<0.000000e+00> : vector<32x32xf32>
        %53 = tpu.matmul %51, %52, %cst_35 {dimension_numbers = #tpu.dot_dimension_numbers<[1], [0], [0], [1], [0, 0, 1, 1], [], []>} : vector<32x32xf32>, vector<32x32xf32>, vector<32x32xf32> -> vector<32x32xf32>
        %c0_36 = arith.constant 0 : index
        %c0_37 = arith.constant 0 : index
        %c0_38 = arith.constant 0 : index
        %54 = vector.load %arg15[%c0_36, %c0_37, %c0_38] : memref<1x32x32xf32, #tpu.memory_space<vmem>>, vector<1x32x32xf32>
        %55 = vector.shape_cast %54 : vector<1x32x32xf32> to vector<32x32xf32>
        %56 = vector.shape_cast %53 : vector<32x32xf32> to vector<1x32x32xf32>
        tpu.vector_store %arg15[%c0_36, %c0_37, %c0_38], %56 {strides = array<i32>} : memref<1x32x32xf32, #tpu.memory_space<vmem>>, vector<1x32x32xf32>,
      } else {
      }
      %c0 = arith.constant 0 : index
      %c0_4 = arith.constant 0 : index
      %9 = vector.load %arg8[%c0, %c0_4] : memref<1x32xf32, #tpu.memory_space<vmem>>, vector<1x32xf32>
      %c0_5 = arith.constant 0 : index
      %c0_6 = arith.constant 0 : index
      %c0_7 = arith.constant 0 : index
      %10 = vector.load %arg3[%c0_5, %c0_6, %c0_7] : memref<1x8x32xf32, #tpu.memory_space<vmem>>, vector<1x8x32xf32>
      %11 = vector.shape_cast %10 : vector<1x8x32xf32> to vector<8x32xf32>
      %c0_8 = arith.constant 0 : index
      %c0_9 = arith.constant 0 : index
      %c0_10 = arith.constant 0 : index
      %12 = vector.load %arg15[%c0_8, %c0_9, %c0_10] : memref<1x32x32xf32, #tpu.memory_space<vmem>>, vector<1x32x32xf32>
      %13 = vector.shape_cast %12 : vector<1x32x32xf32> to vector<32x32xf32>
      %cst_11 = arith.constant dense<0.000000e+00> : vector<8x32xf32>
      %14 = tpu.matmul %11, %13, %cst_11 {dimension_numbers = #tpu.dot_dimension_numbers<[1], [0], [0], [1], [0, 0, 1, 1], [], []>} : vector<8x32xf32>, vector<32x32xf32>, vector<8x32xf32> -> vector<8x32xf32>
      %15 = vector.broadcast %9 : vector<1x32xf32> to vector<8x32xf32>
      %16 = arith.addf %14, %15 : vector<8x32xf32>
      %c0_12 = arith.constant 0 : index
      %c0_13 = arith.constant 0 : index
      %c0_14 = arith.constant 0 : index
      %17 = vector.load %arg11[%c0_12, %c0_13, %c0_14] : memref<1x8x32xf32, #tpu.memory_space<vmem>>, vector<1x8x32xf32>
      %18 = vector.shape_cast %17 : vector<1x8x32xf32> to vector<8x32xf32>
      %19 = vector.shape_cast %16 : vector<8x32xf32> to vector<1x8x32xf32>
      tpu.vector_store %arg11[%c0_12, %c0_13, %c0_14], %19 {strides = array<i32>} : memref<1x8x32xf32, #tpu.memory_space<vmem>>, vector<1x8x32xf32>,
    } else {
    }
    return
  }
  func.func @transform_0(%arg0: i32, %arg1: i32, %arg2: i32) -> (i32, i32, i32) {
    %c0_i32 = arith.constant 0 : i32
    %c0_i32_0 = arith.constant 0 : i32
    return %arg0, %arg2, %c0_i32 : i32, i32, i32
  }
  func.func @transform_1(%arg0: i32, %arg1: i32, %arg2: i32) -> (i32, i32) {
    %c0_i32 = arith.constant 0 : i32
    %c0_i32_0 = arith.constant 0 : i32
    %c0_i32_1 = arith.constant 0 : i32
    return %c0_i32, %c0_i32_0 : i32, i32
  }
  func.func @transform_2(%arg0: i32, %arg1: i32, %arg2: i32) -> (i32, i32) {
    %c0_i32 = arith.constant 0 : i32
    %c0_i32_0 = arith.constant 0 : i32
    %c0_i32_1 = arith.constant 0 : i32
    return %c0_i32, %c0_i32_0 : i32, i32
  }
  func.func @transform_3(%arg0: i32, %arg1: i32, %arg2: i32) -> (i32, i32) {
    %c0_i32 = arith.constant 0 : i32
    %c0_i32_0 = arith.constant 0 : i32
    %c0_i32_1 = arith.constant 0 : i32
    return %c0_i32, %c0_i32_0 : i32, i32
  }
  func.func @transform_4(%arg0: i32, %arg1: i32, %arg2: i32) -> (i32, i32) {
    %c0_i32 = arith.constant 0 : i32
    %c0_i32_0 = arith.constant 0 : i32
    %c0_i32_1 = arith.constant 0 : i32
    return %c0_i32, %c0_i32_0 : i32, i32
  }
  func.func @transform_5(%arg0: i32, %arg1: i32, %arg2: i32) -> (i32, i32) {
    %c0_i32 = arith.constant 0 : i32
    %c0_i32_0 = arith.constant 0 : i32
    %c0_i32_1 = arith.constant 0 : i32
    return %c0_i32, %c0_i32_0 : i32, i32
  }
  func.func @transform_6(%arg0: i32, %arg1: i32, %arg2: i32) -> (i32, i32) {
    %c0_i32 = arith.constant 0 : i32
    %c0_i32_0 = arith.constant 0 : i32
    %c0_i32_1 = arith.constant 0 : i32
    return %c0_i32, %c0_i32_0 : i32, i32
  }
  func.func @transform_7(%arg0: i32, %arg1: i32, %arg2: i32) -> (i32, i32) {
    %c0_i32 = arith.constant 0 : i32
    %c0_i32_0 = arith.constant 0 : i32
    %c0_i32_1 = arith.constant 0 : i32
    return %c0_i32, %c0_i32_0 : i32, i32
  }
  func.func @transform_8(%arg0: i32, %arg1: i32, %arg2: i32) -> (i32, i32, i32) {
    %0 = arith.muli %arg1, %arg2 : i32
    %c0_i32 = arith.constant 0 : i32
    %c0_i32_0 = arith.constant 0 : i32
    return %arg0, %0, %c0_i32 : i32, i32, i32
  }
}

</mosaic_0001>

<llo_original>
// kernel: tpu_custom_call.1
$region0: #{tpu_custom_call.1}
  #allocation0 [shape = 'u32[]', space=smem, size = 0x4, offset = 0x4, fixed_abs, tag = 'smem constant byte address 0x4 - core index']
  #allocation1 [shape = 'u32[144,128]{1,0:T(1,128)}', space=vmem, size = 0x12000, scoped, tag = 'internal scratch']
  #allocation2 [shape = 'f32[1,32,32]{2,1,0:T(8,128)}', space=vmem, size = 0x4000, scoped, tag = 'scratch operand']
  #allocation3 [shape = 'f32[1,32,1]{2,1,0:T(8,128)}', space=vmem, size = 0x4000, scoped, tag = 'scratch operand']
  #allocation4 [shape = 'f32[1,1,32]{2,1,0:T(1,128)}', space=vmem, size = 0x200, scoped, tag = 'scratch operand']
  #allocation5 [shape = 'f32[1,32,32]{2,1,0:T(8,128)}', space=vmem, size = 0x4000, scoped, tag = 'scratch operand']
  %s0 = inlined_call_operand.hbm [shape: f32[2,8,32], index: 0, kind: input, shape index: {}]
  %s1 = inlined_call_operand.hbm [shape: f32[32,32], index: 1, kind: input, shape index: {}]
  %s2 = inlined_call_operand.hbm [shape: f32[32,32], index: 2, kind: input, shape index: {}]
  %s3 = inlined_call_operand.hbm [shape: f32[32,32], index: 3, kind: input, shape index: {}]
  %s4 = inlined_call_operand.hbm [shape: f32[32,32], index: 4, kind: input, shape index: {}]
  %s5 = inlined_call_operand.vmem [shape: f32[1,32], index: 5, kind: input, shape index: {}]
  %s6 = inlined_call_operand.vmem [shape: f32[1,32], index: 6, kind: input, shape index: {}]
  %s7 = inlined_call_operand.hbm [shape: f32[32,32], index: 7, kind: input, shape index: {}]
  %s8 = inlined_call_operand.hbm [shape: f32[2,8,32], index: 8, kind: output, shape index: {}]
  %s9 = sld [smem:[#allocation0]]
  $region105: #{tpu_custom_call.1} parent=0
    _
  %s11 = ssub.s32 1, %s9
  %s12 = scalar_select 0, %s11, %s9
  $region1: #{tpu_custom_call.1} parent=0
    #allocation6 [shape = 'u8[8192]{0}', space=vmem, size = 0x2000, scoped, tag = 'input window, operand 0']
    #allocation7 [shape = 's32[2]{0}', space=sflag, size = 0x8, scoped, tag = 'scoped memory for tpu_custom_call.1']
    #allocation8 [shape = 's32[2]{0}', space=sflag, size = 0x8, scoped, tag = 'scoped memory for tpu_custom_call.1']
    #allocation9 [shape = 'u8[16384]{0}', space=vmem, size = 0x4000, scoped, tag = 'input window, operand 1, single buffered']
    #allocation10 [shape = 's32[1]{0}', space=sflag, size = 0x4, scoped, tag = 'scoped memory for tpu_custom_call.1']
    #allocation11 [shape = 'u8[16384]{0}', space=vmem, size = 0x4000, scoped, tag = 'input window, operand 2, single buffered']
    #allocation12 [shape = 'u8[16384]{0}', space=vmem, size = 0x4000, scoped, tag = 'input window, operand 3, single buffered']
    #allocation13 [shape = 's32[1]{0}', space=sflag, size = 0x4, scoped, tag = 'scoped memory for tpu_custom_call.1']
    #allocation14 [shape = 'u8[16384]{0}', space=vmem, size = 0x4000, scoped, tag = 'input window, operand 4, single buffered']
    #allocation15 [shape = 'u8[16384]{0}', space=vmem, size = 0x4000, scoped, tag = 'input window, operand 7, single buffered']
    #allocation16 [shape = 's32[1]{0}', space=sflag, size = 0x4, scoped, tag = 'scoped memory for tpu_custom_call.1']
    #allocation17 [shape = 'u8[8192]{0}', space=vmem, size = 0x2000, scoped, tag = 'output window, operand 0']
    %13 = vsyncpa [#allocation7], 0
    %s14 = scalar_lea.sflag [#allocation7], 1
    %15 = vsyncpa %s14, 0
    %16 = vsyncpa [#allocation10], 0
    %17 = vsyncpa [#allocation13], 0
    %18 = vsyncpa [#allocation16], 0
    %19 = vsyncpa [#allocation8], 0
    %s20 = scalar_lea.sflag [#allocation8], 1
    %21 = vsyncpa %s20, 0
    loop: start=0, step=1, limit=6
    $region2: #{tpu_custom_call.1} parent=1 // loop_pre_header
      _
    $region3: #{tpu_custom_call.1} parent=1 // loop_header
      %s23 = sphi 0, %s27
      %p24 = scmp.ge.s32.totalorder %s23, 6
      %s30 = sphi 0, %s49
      %s31 = sphi 0, %s45
      %s32 = sphi 0, %s41
      %s33 = sphi 0, %s30
      %s34 = sphi 0, %s31
      %s35 = sphi 0, %s32
      %s36 = sphi 0, %s33
      %s37 = sphi 0, %s34
      %s38 = sphi 0, %s35
      %s54 = sphi 0, %s56
      %s57 = sphi 0, %s54
      %s58 = sphi 0, %s57
      %s74 = sphi 0, %s58
      %s78 = sphi 0, %s78
      %s80 = sphi 0, %s78
      %s81 = sphi 0, %s80
      %s95 = sphi 0, %s81
      %s99 = sphi 0, %s99
      %s101 = sphi 0, %s99
      %s102 = sphi 0, %s101
      %s116 = sphi 0, %s102
      %s120 = sphi 0, %s120
      %s122 = sphi 0, %s120
      %s123 = sphi 0, %s122
      %s137 = sphi 0, %s123
      %s141 = sphi 0, %s141
      %s143 = sphi 0, %s141
      %s144 = sphi 0, %s143
      %s158 = sphi 0, %s144
      %s162 = sphi 0, %s162
      %s164 = sphi 0, %s162
      %s165 = sphi 0, %s164
      %s179 = sphi 0, %s165
      %s183 = sphi 0, %s183
      %s185 = sphi 0, %s183
      %s186 = sphi 0, %s185
      %s200 = sphi 0, %s186
      %s204 = sphi 0, %s204
      %s206 = sphi 0, %s204
      %s207 = sphi 0, %s206
      %s221 = sphi 0, %s207
      %s231 = sphi 0, %s233
      %s234 = sphi 0, %s231
      %s235 = sphi 0, %s234
      %s251 = sphi 0, %s235
    $region4: #{tpu_custom_call.1} parent=1 // loop_header_branch
      %26 = sbr.rel (%p24) target = $region8
    $region5: #{tpu_custom_call.1} parent=1 // loop_body
      %s28 = ssub.s32 %s23, 1
      %s29 = ssub.s32 %s23, 2
      %s39 = sadd.s32 1, %s32
      %p40 = scmp.ge.s32.totalorder %s39, 1
      %s41 = scalar_select %p40, 0, %s39
      %s42 = sadd.s32 1, %s31
      %s43 = scalar_select %p40, %s42, %s31
      %p44 = scmp.ge.s32.totalorder %s43, 2
      %s45 = scalar_select %p44, 0, %s43
      %s46 = sadd.s32 1, %s30
      %s47 = scalar_select %p44, %s46, %s30
      %p48 = scmp.ge.s32.totalorder %s47, 2
      %s49 = scalar_select %p48, 0, %s47
      %s50 = ssub.s32 %s30, %s49
      %s51 = ssub.s32 %s32, %s41
      %s52 = sor.u32 %s50, %s51
      %p53 = scmp.eq.s32.totalorder %s52, 0
      %s55 = sadd.s32 %s54, 1
      %s56 = scalar_select %p53, %s54, %s55
      %p59 = pneg %p53
      %p60 = scmp.eq.s32.totalorder %s23, 3
      %p61 = por %p59, %p60
      %p62 = scmp.ne.s32.totalorder %s54, %s57
      %p63 = scmp.eq.s32.totalorder %s23, 0
      %p64 = por %p62, %p63
      %p65 = scmp.ne.s32.totalorder %s54, %s57
      %p66 = scmp.eq.s32.totalorder %s28, 3
      %p67 = por %p65, %p66
      %p68 = scmp.ne.s32.totalorder %s57, %s58
      %p69 = scmp.eq.s32.totalorder %s28, 0
      %p70 = por %p68, %p69
      %p71 = scmp.ne.s32.totalorder %s57, %s58
      %p72 = scmp.eq.s32.totalorder %s29, 3
      %p73 = por %p71, %p72
      %p75 = scmp.ne.s32.totalorder %s58, %s74
      %p76 = scmp.eq.s32.totalorder %s29, 0
      %p77 = por %p75, %p76
      %s79 = sadd.s32 %s78, 1
      %p82 = scmp.eq.s32.totalorder %s23, 3
      %p83 = scmp.ne.s32.totalorder %s78, %s80
      %p84 = scmp.eq.s32.totalorder %s23, 0
      %p85 = por %p83, %p84
      %p86 = scmp.ne.s32.totalorder %s78, %s80
      %p87 = scmp.eq.s32.totalorder %s28, 3
      %p88 = por %p86, %p87
      %p89 = scmp.ne.s32.totalorder %s80, %s81
      %p90 = scmp.eq.s32.totalorder %s28, 0
      %p91 = por %p89, %p90
      %p92 = scmp.ne.s32.totalorder %s80, %s81
      %p93 = scmp.eq.s32.totalorder %s29, 3
      %p94 = por %p92, %p93
      %p96 = scmp.ne.s32.totalorder %s81, %s95
      %p97 = scmp.eq.s32.totalorder %s29, 0
      %p98 = por %p96, %p97
      %s100 = sadd.s32 %s99, 1
      %p103 = scmp.eq.s32.totalorder %s23, 3
      %p104 = scmp.ne.s32.totalorder %s99, %s101
      %p105 = scmp.eq.s32.totalorder %s23, 0
      %p106 = por %p104, %p105
      %p107 = scmp.ne.s32.totalorder %s99, %s101
      %p108 = scmp.eq.s32.totalorder %s28, 3
      %p109 = por %p107, %p108
      %p110 = scmp.ne.s32.totalorder %s101, %s102
      %p111 = scmp.eq.s32.totalorder %s28, 0
      %p112 = por %p110, %p111
      %p113 = scmp.ne.s32.totalorder %s101, %s102
      %p114 = scmp.eq.s32.totalorder %s29, 3
      %p115 = por %p113, %p114
      %p117 = scmp.ne.s32.totalorder %s102, %s116
      %p118 = scmp.eq.s32.totalorder %s29, 0
      %p119 = por %p117, %p118
      %s121 = sadd.s32 %s120, 1
      %p124 = scmp.eq.s32.totalorder %s23, 3
      %p125 = scmp.ne.s32.totalorder %s120, %s122
      %p126 = scmp.eq.s32.totalorder %s23, 0
      %p127 = por %p125, %p126
      %p128 = scmp.ne.s32.totalorder %s120, %s122
      %p129 = scmp.eq.s32.totalorder %s28, 3
      %p130 = por %p128, %p129
      %p131 = scmp.ne.s32.totalorder %s122, %s123
      %p132 = scmp.eq.s32.totalorder %s28, 0
      %p133 = por %p131, %p132
      %p134 = scmp.ne.s32.totalorder %s122, %s123
      %p135 = scmp.eq.s32.totalorder %s29, 3
      %p136 = por %p134, %p135
      %p138 = scmp.ne.s32.totalorder %s123, %s137
      %p139 = scmp.eq.s32.totalorder %s29, 0
      %p140 = por %p138, %p139
      %s142 = sadd.s32 %s141, 1
      %p145 = scmp.eq.s32.totalorder %s23, 3
      %p146 = scmp.ne.s32.totalorder %s141, %s143
      %p147 = scmp.eq.s32.totalorder %s23, 0
      %p148 = por %p146, %p147
      %p149 = scmp.ne.s32.totalorder %s141, %s143
      %p150 = scmp.eq.s32.totalorder %s28, 3
      %p151 = por %p149, %p150
      %p152 = scmp.ne.s32.totalorder %s143, %s144
      %p153 = scmp.eq.s32.totalorder %s28, 0
      %p154 = por %p152, %p153
      %p155 = scmp.ne.s32.totalorder %s143, %s144
      %p156 = scmp.eq.s32.totalorder %s29, 3
      %p157 = por %p155, %p156
      %p159 = scmp.ne.s32.totalorder %s144, %s158
      %p160 = scmp.eq.s32.totalorder %s29, 0
      %p161 = por %p159, %p160
      %s163 = sadd.s32 %s162, 1
      %p166 = scmp.eq.s32.totalorder %s23, 3
      %p167 = scmp.ne.s32.totalorder %s162, %s164
      %p168 = scmp.eq.s32.totalorder %s23, 0
      %p169 = por %p167, %p168
      %p170 = scmp.ne.s32.totalorder %s162, %s164
      %p171 = scmp.eq.s32.totalorder %s28, 3
      %p172 = por %p170, %p171
      %p173 = scmp.ne.s32.totalorder %s164, %s165
      %p174 = scmp.eq.s32.totalorder %s28, 0
      %p175 = por %p173, %p174
      %p176 = scmp.ne.s32.totalorder %s164, %s165
      %p177 = scmp.eq.s32.totalorder %s29, 3
      %p178 = por %p176, %p177
      %p180 = scmp.ne.s32.totalorder %s165, %s179
      %p181 = scmp.eq.s32.totalorder %s29, 0
      %p182 = por %p180, %p181
      %s184 = sadd.s32 %s183, 1
      %p187 = scmp.eq.s32.totalorder %s23, 3
      %p188 = scmp.ne.s32.totalorder %s183, %s185
      %p189 = scmp.eq.s32.totalorder %s23, 0
      %p190 = por %p188, %p189
      %p191 = scmp.ne.s32.totalorder %s183, %s185
      %p192 = scmp.eq.s32.totalorder %s28, 3
      %p193 = por %p191, %p192
      %p194 = scmp.ne.s32.totalorder %s185, %s186
      %p195 = scmp.eq.s32.totalorder %s28, 0
      %p196 = por %p194, %p195
      %p197 = scmp.ne.s32.totalorder %s185, %s186
      %p198 = scmp.eq.s32.totalorder %s29, 3
      %p199 = por %p197, %p198
      %p201 = scmp.ne.s32.totalorder %s186, %s200
      %p202 = scmp.eq.s32.totalorder %s29, 0
      %p203 = por %p201, %p202
      %s205 = sadd.s32 %s204, 1
      %p208 = scmp.eq.s32.totalorder %s23, 3
      %p209 = scmp.ne.s32.totalorder %s204, %s206
      %p210 = scmp.eq.s32.totalorder %s23, 0
      %p211 = por %p209, %p210
      %p212 = scmp.ne.s32.totalorder %s204, %s206
      %p213 = scmp.eq.s32.totalorder %s28, 3
      %p214 = por %p212, %p213
      %p215 = scmp.ne.s32.totalorder %s206, %s207
      %p216 = scmp.eq.s32.totalorder %s28, 0
      %p217 = por %p215, %p216
      %p218 = scmp.ne.s32.totalorder %s206, %s207
      %p219 = scmp.eq.s32.totalorder %s29, 3
      %p220 = por %p218, %p219
      %p222 = scmp.ne.s32.totalorder %s207, %s221
      %p223 = scmp.eq.s32.totalorder %s29, 0
      %p224 = por %p222, %p223
      %s225 = smul.u32 %s31, %s32
      %s226 = smul.u32 %s45, %s41
      %s227 = ssub.s32 %s30, %s49
      %s228 = ssub.s32 %s225, %s226
      %s229 = sor.u32 %s227, %s228
      %p230 = scmp.eq.s32.totalorder %s229, 0
      %s232 = sadd.s32 %s231, 1
      %s233 = scalar_select %p230, %s231, %s232
      %p236 = pneg %p230
      %p237 = scmp.eq.s32.totalorder %s23, 3
      %p238 = por %p236, %p237
      %p239 = scmp.ne.s32.totalorder %s231, %s234
      %p240 = scmp.eq.s32.totalorder %s23, 0
      %p241 = por %p239, %p240
      %p242 = scmp.ne.s32.totalorder %s231, %s234
      %p243 = scmp.eq.s32.totalorder %s28, 3
      %p244 = por %p242, %p243
      %p245 = scmp.ne.s32.totalorder %s234, %s235
      %p246 = scmp.eq.s32.totalorder %s28, 0
      %p247 = por %p245, %p246
      %p248 = scmp.ne.s32.totalorder %s234, %s235
      %p249 = scmp.eq.s32.totalorder %s29, 3
      %p250 = por %p248, %p249
      %p252 = scmp.ne.s32.totalorder %s235, %s251
      %p253 = scmp.eq.s32.totalorder %s29, 0
      %p254 = por %p252, %p253
      %p255 = scmp.le.s32.totalorder 1, %s23
      %p256 = scmp.lt.s32.totalorder %s23, 5
      %p257 = pnand %p255, %p256
      %p258 = pneg %p257
      // Predicated region
      $region9: #{tpu_custom_call.1} parent=5 // pred_check
        _
      $region10: #{tpu_custom_call.1} parent=5 // pred_check_branch
        %260 = sbr.rel (%p257) target = $region12
      $region11: #{tpu_custom_call.1} parent=5 // pred_region
        %s261 = ssub.s32 %s23, 1
        // Predicated region
        $region13: #{tpu_custom_call.1} parent=11 // pred_check
          %p262 = pneg %p91
        $region14: #{tpu_custom_call.1} parent=11 // pred_check_branch
          %264 = sbr.rel (%p262) target = $region16
        $region15: #{tpu_custom_call.1} parent=11 // pred_region
          %s266 = ssub.s32 512, 512
          %267 = vsyncadd [#allocation10], %s266
          %s268 = sshll.u32 [#allocation9], 4
          %s269 = int_to_ptr.vmem [resolvable:$true] %s268
          %274 = dma.hbm_to_vmem [thread:$0]  %s1, 512, %s269, [#allocation10], 128, 128, 8
        $region16: #{tpu_custom_call.1} parent=11 // pred_fallthru
          _
        // Predicated region
        $region17: #{tpu_custom_call.1} parent=11 // pred_check
          %p275 = pneg %p112
        $region18: #{tpu_custom_call.1} parent=11 // pred_check_branch
          %277 = sbr.rel (%p275) target = $region20
        $region19: #{tpu_custom_call.1} parent=11 // pred_region
          %s279 = ssub.s32 512, 512
          %280 = vsyncadd [#allocation10], %s279
          %s281 = sshll.u32 [#allocation11], 4
          %s282 = int_to_ptr.vmem [resolvable:$true] %s281
          %287 = dma.hbm_to_vmem [thread:$0]  %s2, 512, %s282, [#allocation10], 128, 128, 8
        $region20: #{tpu_custom_call.1} parent=11 // pred_fallthru
          _
        // Predicated region
        $region21: #{tpu_custom_call.1} parent=11 // pred_check
          %p288 = pneg %p133
        $region22: #{tpu_custom_call.1} parent=11 // pred_check_branch
          %290 = sbr.rel (%p288) target = $region24
        $region23: #{tpu_custom_call.1} parent=11 // pred_region
          %s292 = ssub.s32 512, 512
          %293 = vsyncadd [#allocation13], %s292
          %s294 = sshll.u32 [#allocation12], 4
          %s295 = int_to_ptr.vmem [resolvable:$true] %s294
          %300 = dma.hbm_to_vmem [thread:$0]  %s3, 512, %s295, [#allocation13], 128, 128, 8
        $region24: #{tpu_custom_call.1} parent=11 // pred_fallthru
          _
        // Predicated region
        $region25: #{tpu_custom_call.1} parent=11 // pred_check
          %p301 = pneg %p154
        $region26: #{tpu_custom_call.1} parent=11 // pred_check_branch
          %303 = sbr.rel (%p301) target = $region28
        $region27: #{tpu_custom_call.1} parent=11 // pred_region
          %s305 = ssub.s32 512, 512
          %306 = vsyncadd [#allocation13], %s305
          %s307 = sshll.u32 [#allocation14], 4
          %s308 = int_to_ptr.vmem [resolvable:$true] %s307
          %313 = dma.hbm_to_vmem [thread:$0]  %s4, 512, %s308, [#allocation13], 128, 128, 8
        $region28: #{tpu_custom_call.1} parent=11 // pred_fallthru
          _
        // Predicated region
        $region29: #{tpu_custom_call.1} parent=11 // pred_check
          %p314 = pneg %p175
        $region30: #{tpu_custom_call.1} parent=11 // pred_check_branch
          %316 = sbr.rel (%p314) target = $region32
        $region31: #{tpu_custom_call.1} parent=11 // pred_region
          _
        $region32: #{tpu_custom_call.1} parent=11 // pred_fallthru
          _
        // Predicated region
        $region33: #{tpu_custom_call.1} parent=11 // pred_check
          %p317 = pneg %p196
        $region34: #{tpu_custom_call.1} parent=11 // pred_check_branch
          %319 = sbr.rel (%p317) target = $region36
        $region35: #{tpu_custom_call.1} parent=11 // pred_region
          _
        $region36: #{tpu_custom_call.1} parent=11 // pred_fallthru
          _
        // Predicated region
        $region37: #{tpu_custom_call.1} parent=11 // pred_check
          %p320 = pneg %p217
        $region38: #{tpu_custom_call.1} parent=11 // pred_check_branch
          %322 = sbr.rel (%p320) target = $region40
        $region39: #{tpu_custom_call.1} parent=11 // pred_region
          %s324 = ssub.s32 512, 512
          %325 = vsyncadd [#allocation16], %s324
          %s326 = sshll.u32 [#allocation15], 4
          %s327 = int_to_ptr.vmem [resolvable:$true] %s326
          %332 = dma.hbm_to_vmem [thread:$0]  %s7, 512, %s327, [#allocation16], 128, 128, 8
        $region40: #{tpu_custom_call.1} parent=11 // pred_fallthru
          _
      $region12: #{tpu_custom_call.1} parent=5 // pred_fallthru
        _
      %p333 = scmp.lt.s32.totalorder %s23, 4
      // Predicated region
      $region41: #{tpu_custom_call.1} parent=5 // pred_check
        %p334 = pneg %p333
      $region42: #{tpu_custom_call.1} parent=5 // pred_check_branch
        %336 = sbr.rel (%p334) target = $region44
      $region43: #{tpu_custom_call.1} parent=5 // pred_region
        // Predicated region
        $region45: #{tpu_custom_call.1} parent=43 // pred_check
          %p337 = pneg %p64
        $region46: #{tpu_custom_call.1} parent=43 // pred_check_branch
          %339 = sbr.rel (%p337) target = $region48
        $region47: #{tpu_custom_call.1} parent=43 // pred_region
          %s340 = sand.u32 %s54, 1
          %s341 = scalar_lea.sflag [#allocation7], %s340
          %s342 = sand.u32 %s54, 1
          %s343 = smul.addr %s342, 8
          %s344 = scalar_lea.vmem [#allocation6], %s343
          %s346 = ssub.s32 128, 128
          %347 = vsyncadd %s341, %s346
          %s348 = sadd.s32 %s32, %s30
          %s349 = smul.addr %s348, 128
          %s350 = scalar_lea.hbm %s0, %s349
          %s352 = sshll.u32 %s344, 4
          %s353 = int_to_ptr.vmem [resolvable:$true] %s352
          %355 = dma.hbm_to_vmem [thread:$0]  %s350, 128, %s353, %s341
        $region48: #{tpu_custom_call.1} parent=43 // pred_fallthru
          _
      $region44: #{tpu_custom_call.1} parent=5 // pred_fallthru
        _
      %p356 = scmp.le.s32.totalorder 1, %s23
      %p357 = scmp.lt.s32.totalorder %s23, 5
      %p358 = pnand %p356, %p357
      %p359 = pneg %p358
      // Predicated region
      $region49: #{tpu_custom_call.1} parent=5 // pred_check
        _
      $region50: #{tpu_custom_call.1} parent=5 // pred_check_branch
        %361 = sbr.rel (%p358) target = $region52
      $region51: #{tpu_custom_call.1} parent=5 // pred_region
        %s362 = ssub.s32 %s23, 1
        %s363 = sand.u32 %s57, 1
        %s364 = scalar_lea.sflag [#allocation7], %s363
        %s365 = sand.u32 %s57, 1
        %s366 = smul.addr %s365, 8
        %s367 = scalar_lea.vmem [#allocation6], %s366
        // Predicated region
        $region53: #{tpu_custom_call.1} parent=51 // pred_check
          %p368 = pneg %p70
        $region54: #{tpu_custom_call.1} parent=51 // pred_check_branch
          %370 = sbr.rel (%p368) target = $region56
        $region55: #{tpu_custom_call.1} parent=51 // pred_region
          %371 = dma.done %s364, 128
        $region56: #{tpu_custom_call.1} parent=51 // pred_fallthru
          _
        // Predicated region
        $region57: #{tpu_custom_call.1} parent=51 // pred_check
          %p372 = pneg %p91
        $region58: #{tpu_custom_call.1} parent=51 // pred_check_branch
          %374 = sbr.rel (%p372) target = $region60
        $region59: #{tpu_custom_call.1} parent=51 // pred_region
          %375 = dma.done [#allocation10], 512
        $region60: #{tpu_custom_call.1} parent=51 // pred_fallthru
          _
        // Predicated region
        $region61: #{tpu_custom_call.1} parent=51 // pred_check
          %p376 = pneg %p112
        $region62: #{tpu_custom_call.1} parent=51 // pred_check_branch
          %378 = sbr.rel (%p376) target = $region64
        $region63: #{tpu_custom_call.1} parent=51 // pred_region
          %379 = dma.done [#allocation10], 512
        $region64: #{tpu_custom_call.1} parent=51 // pred_fallthru
          _
        // Predicated region
        $region65: #{tpu_custom_call.1} parent=51 // pred_check
          %p380 = pneg %p133
        $region66: #{tpu_custom_call.1} parent=51 // pred_check_branch
          %382 = sbr.rel (%p380) target = $region68
        $region67: #{tpu_custom_call.1} parent=51 // pred_region
          %383 = dma.done [#allocation13], 512
        $region68: #{tpu_custom_call.1} parent=51 // pred_fallthru
          _
        // Predicated region
        $region69: #{tpu_custom_call.1} parent=51 // pred_check
          %p384 = pneg %p154
        $region70: #{tpu_custom_call.1} parent=51 // pred_check_branch
          %386 = sbr.rel (%p384) target = $region72
        $region71: #{tpu_custom_call.1} parent=51 // pred_region
          %387 = dma.done [#allocation13], 512
        $region72: #{tpu_custom_call.1} parent=51 // pred_fallthru
          _
        // Predicated region
        $region73: #{tpu_custom_call.1} parent=51 // pred_check
          %p388 = pneg %p217
        $region74: #{tpu_custom_call.1} parent=51 // pred_check_branch
          %390 = sbr.rel (%p388) target = $region76
        $region75: #{tpu_custom_call.1} parent=51 // pred_region
          %391 = dma.done [#allocation16], 512
        $region76: #{tpu_custom_call.1} parent=51 // pred_fallthru
          _
        %s392 = sand.u32 %s57, 1
        %s393 = scalar_lea.sflag [#allocation7], %s392
        %s394 = sand.u32 %s57, 1
        %s395 = smul.addr %s394, 8
        %s396 = scalar_lea.vmem [#allocation6], %s395
        %p397 = pneg %p70
        %p398 = pneg %p67
        %p399 = pneg %p91
        %p400 = pneg %p88
        %p401 = pneg %p112
        %p402 = pneg %p109
        %p403 = pneg %p133
        %p404 = pneg %p130
        %p405 = pneg %p154
        %p406 = pneg %p151
        %p407 = pneg %p175
        %p408 = pneg %p172
        %p409 = pneg %p196
        %p410 = pneg %p193
        %p411 = pneg %p217
        %p412 = pneg %p214
        %p413 = pneg %p247
        %p414 = pneg %p244
        %s415 = sand.u32 %s234, 1
        %s416 = scalar_lea.sflag [#allocation8], %s415
        %s417 = sand.u32 %s234, 1
        %s418 = smul.addr %s417, 8
        %s419 = scalar_lea.vmem [#allocation17], %s418
        %s420 = smul.u32 %s34, %s35
        %p421 = scmp.eq.s32.totalorder %s34, 0
        // Predicated region
        $region77: #{tpu_custom_call.1} parent=51 // pred_check
          %p422 = pneg %p421
        $region78: #{tpu_custom_call.1} parent=51 // pred_check_branch
          %424 = sbr.rel (%p422) target = $region80
        $region79: #{tpu_custom_call.1} parent=51 // pred_region
          %p425 = scmp.eq.s32.totalorder %s35, 0
          // Predicated region
          $region81: #{tpu_custom_call.1} parent=79 // pred_check
            %p426 = pneg %p425
          $region82: #{tpu_custom_call.1} parent=79 // pred_check_branch
            %428 = sbr.rel (%p426) target = $region84
          $region83: #{tpu_custom_call.1} parent=79 // pred_region
            %vm429 = vcmask 261120
            %430 = vst.msk [vmem:[#allocation2] sm:$0xff] %vm429, 0.0
            %431 = vst.msk [vmem:[#allocation2 + $0x8] sm:$0xff] %vm429, 0.0
            %432 = vst.msk [vmem:[#allocation2 + $0x10] sm:$0xff] %vm429, 0.0
            %433 = vst.msk [vmem:[#allocation2 + $0x18] sm:$0xff] %vm429, 0.0
            %vm434 = vcmask 7168
            %435 = vst.msk [vmem:[#allocation3] sm:$0xff] %vm434, 0.0
            %436 = vst.msk [vmem:[#allocation3 + $0x8] sm:$0xff] %vm434, 0.0
            %437 = vst.msk [vmem:[#allocation3 + $0x10] sm:$0xff] %vm434, 0.0
            %438 = vst.msk [vmem:[#allocation3 + $0x18] sm:$0xff] %vm434, 0.0
            %vm439 = vcmask 253952
            %440 = vst.msk [vmem:[#allocation4] sm:$0x1] %vm439, 0.0
          $region84: #{tpu_custom_call.1} parent=79 // pred_fallthru
            _
          %v441 = vld [vmem:[%s367] sm:$0xff]
          %v442 = vld [vmem:[#allocation9] sm:$0xff]
          %v443 = vld [vmem:[#allocation9 + $0x8] sm:$0xff]
          %v444 = vld [vmem:[#allocation9 + $0x10] sm:$0xff]
          %v445 = vld [vmem:[#allocation9 + $0x18] sm:$0xff]
          %vm446 = vcmask 261120
          %v448 = vsel %vm446, %v441, 0
          %450 = vmatprep.subr.mxu0 0.0
          %451 = vmatpush1.msra.mxu0 0.0
          %452 = vmatprep.subr.mxu0 0.0
          %453 = vmatpush1.msra.mxu0 0.0
          %454 = vmatprep.subr.mxu0 0.0
          %455 = vmatpush1.msra.mxu0 0.0
          %456 = vmatprep.subr.mxu0 0.0
          %457 = vmatpush1.msra.mxu0 0.0
          %458 = vmatprep.subr.mxu0 0.0
          %459 = vmatpush1.msra.mxu0 0.0
          %460 = vmatprep.subr.mxu0 0.0
          %461 = vmatpush1.msra.mxu0 0.0
          %462 = vmatprep.subr.mxu0 0.0
          %463 = vmatpush1.msra.mxu0 0.0
          %464 = vmatprep.subr.mxu0 0.0
          %465 = vmatpush1.msra.mxu0 0.0
          %466 = vmatprep.subr.mxu0 0.0
          %467 = vmatpush1.msra.mxu0 0.0
          %468 = vmatprep.subr.mxu0 0.0
          %469 = vmatpush1.msra.mxu0 0.0
          %470 = vmatprep.subr.mxu0 0.0
          %471 = vmatpush1.msra.mxu0 0.0
          %472 = vmatprep.subr.mxu0 0.0
          %473 = vmatpush1.msra.mxu0 0.0
          %474 = vmatprep.subr.mxu0 0.0
          %475 = vmatpush1.msra.mxu0 %v445
          %476 = vmatprep.subr.mxu0 0.0
          %477 = vmatpush1.msra.mxu0 %v444
          %478 = vmatprep.subr.mxu0 0.0
          %479 = vmatpush1.msra.mxu0 %v443
          %480 = vmatprep.subr.mxu0 0.0
          %481 = vmatpush1.msra.mxu0 %v442
          %482 = vmatprep.subr.mxu0 0.0
          %483 = vmatpush2.msra.mxu0 0.0
          %484 = vmatprep.subr.mxu0 0.0
          %485 = vmatpush2.msra.mxu0 0.0
          %486 = vmatprep.subr.mxu0 0.0
          %487 = vmatpush2.msra.mxu0 0.0
          %488 = vmatprep.subr.mxu0 0.0
          %489 = vmatpush2.msra.mxu0 0.0
          %490 = vmatprep.subr.mxu0 0.0
          %491 = vmatpush2.msra.mxu0 0.0
          %492 = vmatprep.subr.mxu0 0.0
          %493 = vmatpush2.msra.mxu0 0.0
          %494 = vmatprep.subr.mxu0 0.0
          %495 = vmatpush2.msra.mxu0 0.0
          %496 = vmatprep.subr.mxu0 0.0
          %497 = vmatpush2.msra.mxu0 0.0
          %498 = vmatprep.subr.mxu0 0.0
          %499 = vmatpush2.msra.mxu0 0.0
          %500 = vmatprep.subr.mxu0 0.0
          %501 = vmatpush2.msra.mxu0 0.0
          %502 = vmatprep.subr.mxu0 0.0
          %503 = vmatpush2.msra.mxu0 0.0
          %504 = vmatprep.subr.mxu0 0.0
          %505 = vmatpush2.msra.mxu0 0.0
          %506 = vmatprep.subr.mxu0 0.0
          %507 = vmatpush2.msra.mxu0 0.0
          %508 = vmatprep.subr.mxu0 0.0
          %509 = vmatpush2.msra.mxu0 0.0
          %510 = vmatprep.subr.mxu0 0.0
          %511 = vmatpush2.msra.mxu0 0.0
          %512 = vmatprep.subr.mxu0 0.0
          %513 = vmatpush2.msra.mxu0 0.0
          %514 = vmatprep.mubr.f32.mxu0 0.0
          %515 = vmatmul.mubr.f32.gmra.mxu0 %v448
          %v516 = vpop.f32.mrf.mxu0
          %v517 = vadd.f32 0.0, %v516
          %v518 = vpop.f32.mrf.mxu0
          %519 = vdwg.mxu0
          %v520 = vld [vmem:[#allocation11] sm:$0xff]
          %v521 = vld [vmem:[#allocation11 + $0x8] sm:$0xff]
          %v522 = vld [vmem:[#allocation11 + $0x10] sm:$0xff]
          %v523 = vld [vmem:[#allocation11 + $0x18] sm:$0xff]
          %524 = vmatprep.subr.mxu0 0.0
          %525 = vmatpush1.msra.mxu0 0.0
          %526 = vmatprep.subr.mxu0 0.0
          %527 = vmatpush1.msra.mxu0 0.0
          %528 = vmatprep.subr.mxu0 0.0
          %529 = vmatpush1.msra.mxu0 0.0
          %530 = vmatprep.subr.mxu0 0.0
          %531 = vmatpush1.msra.mxu0 0.0
          %532 = vmatprep.subr.mxu0 0.0
          %533 = vmatpush1.msra.mxu0 0.0
          %534 = vmatprep.subr.mxu0 0.0
          %535 = vmatpush1.msra.mxu0 0.0
          %536 = vmatprep.subr.mxu0 0.0
          %537 = vmatpush1.msra.mxu0 0.0
          %538 = vmatprep.subr.mxu0 0.0
          %539 = vmatpush1.msra.mxu0 0.0
          %540 = vmatprep.subr.mxu0 0.0
          %541 = vmatpush1.msra.mxu0 0.0
          %542 = vmatprep.subr.mxu0 0.0
          %543 = vmatpush1.msra.mxu0 0.0
          %544 = vmatprep.subr.mxu0 0.0
          %545 = vmatpush1.msra.mxu0 0.0
          %546 = vmatprep.subr.mxu0 0.0
          %547 = vmatpush1.msra.mxu0 0.0
          %548 = vmatprep.subr.mxu0 0.0
          %549 = vmatpush1.msra.mxu0 %v523
          %550 = vmatprep.subr.mxu0 0.0
          %551 = vmatpush1.msra.mxu0 %v522
          %552 = vmatprep.subr.mxu0 0.0
          %553 = vmatpush1.msra.mxu0 %v521
          %554 = vmatprep.subr.mxu0 0.0
          %555 = vmatpush1.msra.mxu0 %v520
          %556 = vmatprep.subr.mxu0 0.0
          %557 = vmatpush2.msra.mxu0 0.0
          %558 = vmatprep.subr.mxu0 0.0
          %559 = vmatpush2.msra.mxu0 0.0
          %560 = vmatprep.subr.mxu0 0.0
          %561 = vmatpush2.msra.mxu0 0.0
          %562 = vmatprep.subr.mxu0 0.0
          %563 = vmatpush2.msra.mxu0 0.0
          %564 = vmatprep.subr.mxu0 0.0
          %565 = vmatpush2.msra.mxu0 0.0
          %566 = vmatprep.subr.mxu0 0.0
          %567 = vmatpush2.msra.mxu0 0.0
          %568 = vmatprep.subr.mxu0 0.0
          %569 = vmatpush2.msra.mxu0 0.0
          %570 = vmatprep.subr.mxu0 0.0
          %571 = vmatpush2.msra.mxu0 0.0
          %572 = vmatprep.subr.mxu0 0.0
          %573 = vmatpush2.msra.mxu0 0.0
          %574 = vmatprep.subr.mxu0 0.0
          %575 = vmatpush2.msra.mxu0 0.0
          %576 = vmatprep.subr.mxu0 0.0
          %577 = vmatpush2.msra.mxu0 0.0
          %578 = vmatprep.subr.mxu0 0.0
          %579 = vmatpush2.msra.mxu0 0.0
          %580 = vmatprep.subr.mxu0 0.0
          %581 = vmatpush2.msra.mxu0 0.0
          %582 = vmatprep.subr.mxu0 0.0
          %583 = vmatpush2.msra.mxu0 0.0
          %584 = vmatprep.subr.mxu0 0.0
          %585 = vmatpush2.msra.mxu0 0.0
          %586 = vmatprep.subr.mxu0 0.0
          %587 = vmatpush2.msra.mxu0 0.0
          %588 = vmatprep.mubr.f32.mxu0 0.0
          %589 = vmatmul.mubr.f32.gmra.mxu0 %v448
          %v590 = vpop.f32.mrf.mxu0
          %v591 = vadd.f32 0.0, %v590
          %v592 = vpop.f32.mrf.mxu0
          %593 = vdwg.mxu0
          %v594 = vld [vmem:[#allocation2] sm:$0xff]
          %v595 = vld [vmem:[#allocation2 + $0x8] sm:$0xff]
          %v596 = vld [vmem:[#allocation2 + $0x10] sm:$0xff]
          %v597 = vld [vmem:[#allocation2 + $0x18] sm:$0xff]
          %598 = vxpose.xlu0.b32.start [1/16] %v517, 128
          %599 = vxpose.xlu0.b32.cont [2/16] 0.0, 128
          %600 = vxpose.xlu0.b32.cont [3/16] 0.0, 128
          %601 = vxpose.xlu0.b32.cont [4/16] 0.0, 128
          %602 = vxpose.xlu0.b32.cont [5/16] 0.0, 128
          %603 = vxpose.xlu0.b32.cont [6/16] 0.0, 128
          %604 = vxpose.xlu0.b32.cont [7/16] 0.0, 128
          %605 = vxpose.xlu0.b32.cont [8/16] 0.0, 128
          %606 = vxpose.xlu0.b32.cont [9/16] 0.0, 128
          %607 = vxpose.xlu0.b32.cont [10/16] 0.0, 128
          %608 = vxpose.xlu0.b32.cont [11/16] 0.0, 128
          %609 = vxpose.xlu0.b32.cont [12/16] 0.0, 128
          %610 = vxpose.xlu0.b32.cont [13/16] 0.0, 128
          %611 = vxpose.xlu0.b32.cont [14/16] 0.0, 128
          %612 = vxpose.xlu0.b32.cont [15/16] 0.0, 128
          %613 = vxpose.xlu0.b32.end [16/16] 0.0, 128
          %v614 = vpop.trf.xlu0
          %v615 = vpop.trf.xlu0
          %v616 = vpop.trf.xlu0
          %v617 = vpop.trf.xlu0
          %v618 = vpop.trf.xlu0
          %v619 = vpop.trf.xlu0
          %v620 = vpop.trf.xlu0
          %v621 = vpop.trf.xlu0
          %v622 = vpop.trf.xlu0
          %v623 = vpop.trf.xlu0
          %v624 = vpop.trf.xlu0
          %v625 = vpop.trf.xlu0
          %v626 = vpop.trf.xlu0
          %v627 = vpop.trf.xlu0
          %v628 = vpop.trf.xlu0
          %v629 = vpop.trf.xlu0
          %vm630 = vcmask 64512
          %v632 = vsel %vm630, %v614, 0
          %v635 = vsel %vm630, %v615, 0
          %v638 = vsel %vm630, %v616, 0
          %v641 = vsel %vm630, %v617, 0
          %643 = vmatprep.subr.mxu0 0.0
          %644 = vmatpush1.msra.mxu0 0.0
          %645 = vmatprep.subr.mxu0 0.0
          %646 = vmatpush1.msra.mxu0 0.0
          %647 = vmatprep.subr.mxu0 0.0
          %648 = vmatpush1.msra.mxu0 0.0
          %649 = vmatprep.subr.mxu0 0.0
          %650 = vmatpush1.msra.mxu0 0.0
          %651 = vmatprep.subr.mxu0 0.0
          %652 = vmatpush1.msra.mxu0 0.0
          %653 = vmatprep.subr.mxu0 0.0
          %654 = vmatpush1.msra.mxu0 0.0
          %655 = vmatprep.subr.mxu0 0.0
          %656 = vmatpush1.msra.mxu0 0.0
          %657 = vmatprep.subr.mxu0 0.0
          %658 = vmatpush1.msra.mxu0 0.0
          %659 = vmatprep.subr.mxu0 0.0
          %660 = vmatpush1.msra.mxu0 0.0
          %661 = vmatprep.subr.mxu0 0.0
          %662 = vmatpush1.msra.mxu0 0.0
          %663 = vmatprep.subr.mxu0 0.0
          %664 = vmatpush1.msra.mxu0 0.0
          %665 = vmatprep.subr.mxu0 0.0
          %666 = vmatpush1.msra.mxu0 0.0
          %667 = vmatprep.subr.mxu0 0.0
          %668 = vmatpush1.msra.mxu0 0.0
          %669 = vmatprep.subr.mxu0 0.0
          %670 = vmatpush1.msra.mxu0 0.0
          %671 = vmatprep.subr.mxu0 0.0
          %672 = vmatpush1.msra.mxu0 0.0
          %673 = vmatprep.subr.mxu0 0.0
          %674 = vmatpush1.msra.mxu0 %v591
          %675 = vmatprep.subr.mxu0 0.0
          %676 = vmatpush2.msra.mxu0 0.0
          %677 = vmatprep.subr.mxu0 0.0
          %678 = vmatpush2.msra.mxu0 0.0
          %679 = vmatprep.subr.mxu0 0.0
          %680 = vmatpush2.msra.mxu0 0.0
          %681 = vmatprep.subr.mxu0 0.0
          %682 = vmatpush2.msra.mxu0 0.0
          %683 = vmatprep.subr.mxu0 0.0
          %684 = vmatpush2.msra.mxu0 0.0
          %685 = vmatprep.subr.mxu0 0.0
          %686 = vmatpush2.msra.mxu0 0.0
          %687 = vmatprep.subr.mxu0 0.0
          %688 = vmatpush2.msra.mxu0 0.0
          %689 = vmatprep.subr.mxu0 0.0
          %690 = vmatpush2.msra.mxu0 0.0
          %691 = vmatprep.subr.mxu0 0.0
          %692 = vmatpush2.msra.mxu0 0.0
          %693 = vmatprep.subr.mxu0 0.0
          %694 = vmatpush2.msra.mxu0 0.0
          %695 = vmatprep.subr.mxu0 0.0
          %696 = vmatpush2.msra.mxu0 0.0
          %697 = vmatprep.subr.mxu0 0.0
          %698 = vmatpush2.msra.mxu0 0.0
          %699 = vmatprep.subr.mxu0 0.0
          %700 = vmatpush2.msra.mxu0 0.0
          %701 = vmatprep.subr.mxu0 0.0
          %702 = vmatpush2.msra.mxu0 0.0
          %703 = vmatprep.subr.mxu0 0.0
          %704 = vmatpush2.msra.mxu0 0.0
          %705 = vmatprep.subr.mxu0 0.0
          %706 = vmatpush2.msra.mxu0 0.0
          %707 = vmatprep.mubr.f32.mxu0 0.0
          %708 = vmatmul.mubr.f32.gmra.mxu0 %v632
          %v709 = vpop.f32.mrf.mxu0
          %v710 = vadd.f32 0.0, %v709
          %v711 = vpop.f32.mrf.mxu0
          %712 = vmatprep.mubr.f32.mxu0 0.0
          %713 = vmatmul.mubr.f32.gmra.mxu0 %v635
          %v714 = vpop.f32.mrf.mxu0
          %v715 = vadd.f32 0.0, %v714
          %v716 = vpop.f32.mrf.mxu0
          %717 = vmatprep.mubr.f32.mxu0 0.0
          %718 = vmatmul.mubr.f32.gmra.mxu0 %v638
          %v719 = vpop.f32.mrf.mxu0
          %v720 = vadd.f32 0.0, %v719
          %v721 = vpop.f32.mrf.mxu0
          %722 = vmatprep.mubr.f32.mxu0 0.0
          %723 = vmatmul.mubr.f32.gmra.mxu0 %v641
          %v724 = vpop.f32.mrf.mxu0
          %v725 = vadd.f32 0.0, %v724
          %v726 = vpop.f32.mrf.mxu0
          %727 = vdwg.mxu0
          %v728 = vadd.f32 %v594, %v710
          %v729 = vadd.f32 %v595, %v715
          %v730 = vadd.f32 %v596, %v720
          %v731 = vadd.f32 %v597, %v725
          %732 = vst.msk [vmem:[#allocation2] sm:$0xff] %vm446, %v728
          %733 = vst.msk [vmem:[#allocation2 + $0x8] sm:$0xff] %vm446, %v729
          %734 = vst.msk [vmem:[#allocation2 + $0x10] sm:$0xff] %vm446, %v730
          %735 = vst.msk [vmem:[#allocation2 + $0x18] sm:$0xff] %vm446, %v731
          %v736 = vld [vmem:[#allocation3] sm:$0xff]
          %v737 = vld [vmem:[#allocation3 + $0x8] sm:$0xff]
          %v738 = vld [vmem:[#allocation3 + $0x10] sm:$0xff]
          %v739 = vld [vmem:[#allocation3 + $0x18] sm:$0xff]
          %v740 = vmul.f32 %v517, %v517
          %741 = vxpose.xlu0.b32.start [1/16] %v740, 128
          %742 = vxpose.xlu0.b32.cont [2/16] 0.0, 128
          %743 = vxpose.xlu0.b32.cont [3/16] 0.0, 128
          %744 = vxpose.xlu0.b32.cont [4/16] 0.0, 128
          %745 = vxpose.xlu0.b32.cont [5/16] 0.0, 128
          %746 = vxpose.xlu0.b32.cont [6/16] 0.0, 128
          %747 = vxpose.xlu0.b32.cont [7/16] 0.0, 128
          %748 = vxpose.xlu0.b32.cont [8/16] 0.0, 128
          %749 = vxpose.xlu0.b32.cont [9/16] 0.0, 128
          %750 = vxpose.xlu0.b32.cont [10/16] 0.0, 128
          %751 = vxpose.xlu0.b32.cont [11/16] 0.0, 128
          %752 = vxpose.xlu0.b32.cont [12/16] 0.0, 128
          %753 = vxpose.xlu0.b32.cont [13/16] 0.0, 128
          %754 = vxpose.xlu0.b32.cont [14/16] 0.0, 128
          %755 = vxpose.xlu0.b32.cont [15/16] 0.0, 128
          %756 = vxpose.xlu0.b32.end [16/16] 0.0, 128
          %v757 = vpop.trf.xlu0
          %v758 = vpop.trf.xlu0
          %v759 = vpop.trf.xlu0
          %v760 = vpop.trf.xlu0
          %v761 = vpop.trf.xlu0
          %v762 = vpop.trf.xlu0
          %v763 = vpop.trf.xlu0
          %v764 = vpop.trf.xlu0
          %v765 = vpop.trf.xlu0
          %v766 = vpop.trf.xlu0
          %v767 = vpop.trf.xlu0
          %v768 = vpop.trf.xlu0
          %v769 = vpop.trf.xlu0
          %v770 = vpop.trf.xlu0
          %v771 = vpop.trf.xlu0
          %v772 = vpop.trf.xlu0
          %v774 = vsel %vm630, %v757, 0
          %v777 = vsel %vm630, %v758, 0
          %v780 = vsel %vm630, %v759, 0
          %v783 = vsel %vm630, %v760, 0
          %785 = vmatprep.subr.mxu0 0.0
          %786 = vmatpush1.msra.mxu0 0.0
          %787 = vmatprep.subr.mxu0 0.0
          %788 = vmatpush1.msra.mxu0 0.0
          %789 = vmatprep.subr.mxu0 0.0
          %790 = vmatpush1.msra.mxu0 0.0
          %791 = vmatprep.subr.mxu0 0.0
          %792 = vmatpush1.msra.mxu0 0.0
          %793 = vmatprep.subr.mxu0 0.0
          %794 = vmatpush1.msra.mxu0 0.0
          %795 = vmatprep.subr.mxu0 0.0
          %796 = vmatpush1.msra.mxu0 0.0
          %797 = vmatprep.subr.mxu0 0.0
          %798 = vmatpush1.msra.mxu0 0.0
          %799 = vmatprep.subr.mxu0 0.0
          %800 = vmatpush1.msra.mxu0 0.0
          %801 = vmatprep.subr.mxu0 0.0
          %802 = vmatpush1.msra.mxu0 0.0
          %803 = vmatprep.subr.mxu0 0.0
          %804 = vmatpush1.msra.mxu0 0.0
          %805 = vmatprep.subr.mxu0 0.0
          %806 = vmatpush1.msra.mxu0 0.0
          %807 = vmatprep.subr.mxu0 0.0
          %808 = vmatpush1.msra.mxu0 0.0
          %809 = vmatprep.subr.mxu0 0.0
          %810 = vmatpush1.msra.mxu0 0.0
          %811 = vmatprep.subr.mxu0 0.0
          %812 = vmatpush1.msra.mxu0 0.0
          %813 = vmatprep.subr.mxu0 0.0
          %814 = vmatpush1.msra.mxu0 0.0
          %815 = vmatprep.subr.mxu0 0.0
          %816 = vmatpush1.msra.mxu0 1.0
          %817 = vmatprep.subr.mxu0 0.0
          %818 = vmatpush2.msra.mxu0 0.0
          %819 = vmatprep.subr.mxu0 0.0
          %820 = vmatpush2.msra.mxu0 0.0
          %821 = vmatprep.subr.mxu0 0.0
          %822 = vmatpush2.msra.mxu0 0.0
          %823 = vmatprep.subr.mxu0 0.0
          %824 = vmatpush2.msra.mxu0 0.0
          %825 = vmatprep.subr.mxu0 0.0
          %826 = vmatpush2.msra.mxu0 0.0
          %827 = vmatprep.subr.mxu0 0.0
          %828 = vmatpush2.msra.mxu0 0.0
          %829 = vmatprep.subr.mxu0 0.0
          %830 = vmatpush2.msra.mxu0 0.0
          %831 = vmatprep.subr.mxu0 0.0
          %832 = vmatpush2.msra.mxu0 0.0
          %833 = vmatprep.subr.mxu0 0.0
          %834 = vmatpush2.msra.mxu0 0.0
          %835 = vmatprep.subr.mxu0 0.0
          %836 = vmatpush2.msra.mxu0 0.0
          %837 = vmatprep.subr.mxu0 0.0
          %838 = vmatpush2.msra.mxu0 0.0
          %839 = vmatprep.subr.mxu0 0.0
          %840 = vmatpush2.msra.mxu0 0.0
          %841 = vmatprep.subr.mxu0 0.0
          %842 = vmatpush2.msra.mxu0 0.0
          %843 = vmatprep.subr.mxu0 0.0
          %844 = vmatpush2.msra.mxu0 0.0
          %845 = vmatprep.subr.mxu0 0.0
          %846 = vmatpush2.msra.mxu0 0.0
          %847 = vmatprep.subr.mxu0 0.0
          %848 = vmatpush2.msra.mxu0 0.0
          %849 = vmatprep.mubr.f32.mxu0 0.0
          %850 = vmatmul.mubr.f32.gmra.mxu0 %v774
          %v851 = vpop.f32.mrf.mxu0
          %v852 = vadd.f32 0.0, %v851
          %v853 = vpop.f32.mrf.mxu0
          %854 = vmatprep.mubr.f32.mxu0 0.0
          %855 = vmatmul.mubr.f32.gmra.mxu0 %v777
          %v856 = vpop.f32.mrf.mxu0
          %v857 = vadd.f32 0.0, %v856
          %v858 = vpop.f32.mrf.mxu0
          %859 = vmatprep.mubr.f32.mxu0 0.0
          %860 = vmatmul.mubr.f32.gmra.mxu0 %v780
          %v861 = vpop.f32.mrf.mxu0
          %v862 = vadd.f32 0.0, %v861
          %v863 = vpop.f32.mrf.mxu0
          %864 = vmatprep.mubr.f32.mxu0 0.0
          %865 = vmatmul.mubr.f32.gmra.mxu0 %v783
          %v866 = vpop.f32.mrf.mxu0
          %v867 = vadd.f32 0.0, %v866
          %v868 = vpop.f32.mrf.mxu0
          %869 = vdwg.mxu0
          %v870 = vadd.f32 %v736, %v852
          %v871 = vadd.f32 %v737, %v857
          %v872 = vadd.f32 %v738, %v862
          %v873 = vadd.f32 %v739, %v867
          %vm874 = vcmask 7168
          %875 = vst.msk [vmem:[#allocation3] sm:$0xff] %vm874, %v870
          %876 = vst.msk [vmem:[#allocation3 + $0x8] sm:$0xff] %vm874, %v871
          %877 = vst.msk [vmem:[#allocation3 + $0x10] sm:$0xff] %vm874, %v872
          %878 = vst.msk [vmem:[#allocation3 + $0x18] sm:$0xff] %vm874, %v873
          %v879 = vld [vmem:[#allocation4] sm:$0x1]
          %v880 = vmul.f32 %v591, %v591
          %v881 = vsel %vm446, %v880, 0.0
          %v882 = vrot.slane %v881, 4
          %v883 = vadd.f32 %v881, %v882
          %v884 = vrot.slane %v883, 2
          %v885 = vadd.f32 %v883, %v884
          %v886 = vrot.slane %v885, 1
          %v887 = vadd.f32 %v885, %v886
          %v888 = vadd.f32 %v879, %v887
          %vm889 = vcmask 253952
          %890 = vst.msk [vmem:[#allocation4] sm:$0x1] %vm889, %v888
        $region80: #{tpu_custom_call.1} parent=51 // pred_fallthru
          _
        %p891 = scmp.eq.s32.totalorder %s34, 1
        // Predicated region
        $region85: #{tpu_custom_call.1} parent=51 // pred_check
          %p892 = pneg %p891
        $region86: #{tpu_custom_call.1} parent=51 // pred_check_branch
          %894 = sbr.rel (%p892) target = $region88
        $region87: #{tpu_custom_call.1} parent=51 // pred_region
          %p895 = scmp.eq.s32.totalorder %s35, 0
          // Predicated region
          $region89: #{tpu_custom_call.1} parent=87 // pred_check
            %p896 = pneg %p895
          $region90: #{tpu_custom_call.1} parent=87 // pred_check_branch
            %898 = sbr.rel (%p896) target = $region92
          $region91: #{tpu_custom_call.1} parent=87 // pred_region
            %v899 = vld [vmem:[%s6] sm:$0x1]
            %v900 = vld [vmem:[#allocation15] sm:$0xff]
            %v901 = vld [vmem:[#allocation15 + $0x8] sm:$0xff]
            %v902 = vld [vmem:[#allocation15 + $0x10] sm:$0xff]
            %v903 = vld [vmem:[#allocation15 + $0x18] sm:$0xff]
            %v904 = vld [vmem:[#allocation3] sm:$0xff]
            %v905 = vld [vmem:[#allocation3 + $0x8] sm:$0xff]
            %v906 = vld [vmem:[#allocation3 + $0x10] sm:$0xff]
            %v907 = vld [vmem:[#allocation3 + $0x18] sm:$0xff]
            %v908 = vmax.f32 %v904, 1e-24
            %v909 = vmax.f32 %v905, 1e-24
            %v910 = vmax.f32 %v906, 1e-24
            %v911 = vmax.f32 %v907, 1e-24
            %v912 = vrsqrt.pop %v908
            %v913 = vrsqrt.pop %v909
            %v914 = vrsqrt.pop %v910
            %v915 = vrsqrt.pop %v911
            %v916 = vld [vmem:[#allocation4] sm:$0x1]
            %v917 = vmax.f32 %v916, 1e-24
            %v918 = vrsqrt.pop %v917
            %v919 = vld [vmem:[#allocation2] sm:$0xff]
            %v920 = vld [vmem:[#allocation2 + $0x8] sm:$0xff]
            %v921 = vld [vmem:[#allocation2 + $0x10] sm:$0xff]
            %v922 = vld [vmem:[#allocation2 + $0x18] sm:$0xff]
            %924 = vset.pattern.permute.xlu0 0
            %925 = vperm.xlu0 %924, %v912
            %v926 = vpop.permute.xlu0 %925
            %929 = vset.pattern.permute.xlu0 0
            %930 = vperm.xlu0 %929, %v913
            %v931 = vpop.permute.xlu0 %930
            %934 = vset.pattern.permute.xlu0 0
            %935 = vperm.xlu0 %934, %v914
            %v936 = vpop.permute.xlu0 %935
            %939 = vset.pattern.permute.xlu0 0
            %940 = vperm.xlu0 %939, %v915
            %v941 = vpop.permute.xlu0 %940
            %v943 = vmul.f32 %v919, %v926
            %v944 = vmul.f32 %v920, %v931
            %v945 = vmul.f32 %v921, %v936
            %v946 = vmul.f32 %v922, %v941
            %v947 = vmul.f32 %v918, %v899
            %v949 = vlaneseq
            %v950 = vshrl.u32 %v949, 7
            %v951 = vsub.s32 0, %v950
            %v952 = vrot.slane %v947, %v951
            %v954 = vmul.f32 %v943, %v952
            %v955 = vmul.f32 %v944, %v952
            %v956 = vmul.f32 %v945, %v952
            %v957 = vmul.f32 %v946, %v952
            %v958 = vadd.f32 %v954, %v900
            %v959 = vadd.f32 %v955, %v901
            %v960 = vadd.f32 %v956, %v902
            %v961 = vadd.f32 %v957, %v903
            %vm962 = vcmask 261120
            %v963 = vsel %vm962, %v958, -inf
            %964 = vmax.xlane.f32.xlu0 %v963
            %v965 = vpop.xlane.xlu0 %964
            %v966 = vsel %vm962, %v959, -inf
            %967 = vmax.xlane.f32.xlu0 %v966
            %v968 = vpop.xlane.xlu0 %967
            %v969 = vsel %vm962, %v960, -inf
            %970 = vmax.xlane.f32.xlu0 %v969
            %v971 = vpop.xlane.xlu0 %970
            %v972 = vsel %vm962, %v961, -inf
            %973 = vmax.xlane.f32.xlu0 %v972
            %v974 = vpop.xlane.xlu0 %973
            %v975 = vsub.f32 %v958, %v965
            %v976 = vsub.f32 %v959, %v968
            %v977 = vsub.f32 %v960, %v971
            %v978 = vsub.f32 %v961, %v974
            %v979 = vmul.f32 %v975, 1.442695
            %v980 = vpow.pop %v979
            %v981 = vmul.f32 %v976, 1.442695
            %v982 = vpow.pop %v981
            %v983 = vmul.f32 %v977, 1.442695
            %v984 = vpow.pop %v983
            %v985 = vmul.f32 %v978, 1.442695
            %v986 = vpow.pop %v985
            %v987 = vsel %vm962, %v980, 0.0
            %988 = vadd.xlane.f32.xlu0 %v987
            %v989 = vpop.xlane.xlu0 %988
            %v990 = vsel %vm962, %v982, 0.0
            %991 = vadd.xlane.f32.xlu0 %v990
            %v992 = vpop.xlane.xlu0 %991
            %v993 = vsel %vm962, %v984, 0.0
            %994 = vadd.xlane.f32.xlu0 %v993
            %v995 = vpop.xlane.xlu0 %994
            %v996 = vsel %vm962, %v986, 0.0
            %997 = vadd.xlane.f32.xlu0 %v996
            %v998 = vpop.xlane.xlu0 %997
            %v999 = vrcp.pop %v989
            %v1000 = vrcp.pop %v992
            %v1001 = vrcp.pop %v995
            %v1002 = vrcp.pop %v998
            %v1003 = vmul.f32 %v980, %v999
            %v1004 = vmul.f32 %v982, %v1000
            %v1005 = vmul.f32 %v984, %v1001
            %v1006 = vmul.f32 %v986, %v1002
            %v1007 = vld [vmem:[#allocation12] sm:$0xff]
            %v1008 = vld [vmem:[#allocation12 + $0x8] sm:$0xff]
            %v1009 = vld [vmem:[#allocation12 + $0x10] sm:$0xff]
            %v1010 = vld [vmem:[#allocation12 + $0x18] sm:$0xff]
            %v1012 = vsel %vm962, %v1007, 0
            %v1015 = vsel %vm962, %v1008, 0
            %v1018 = vsel %vm962, %v1009, 0
            %v1021 = vsel %vm962, %v1010, 0
            %v1024 = vsel %vm962, %v1003, 0
            %v1027 = vsel %vm962, %v1004, 0
            %v1030 = vsel %vm962, %v1005, 0
            %v1033 = vsel %vm962, %v1006, 0
            %1035 = vmatprep.subr.mxu0 0.0
            %1036 = vmatpush1.xpose.msra.mxu0 0.0
            %1037 = vmatprep.subr.mxu0 0.0
            %1038 = vmatpush1.xpose.msra.mxu0 0.0
            %1039 = vmatprep.subr.mxu0 0.0
            %1040 = vmatpush1.xpose.msra.mxu0 0.0
            %1041 = vmatprep.subr.mxu0 0.0
            %1042 = vmatpush1.xpose.msra.mxu0 0.0
            %1043 = vmatprep.subr.mxu0 0.0
            %1044 = vmatpush1.xpose.msra.mxu0 0.0
            %1045 = vmatprep.subr.mxu0 0.0
            %1046 = vmatpush1.xpose.msra.mxu0 0.0
            %1047 = vmatprep.subr.mxu0 0.0
            %1048 = vmatpush1.xpose.msra.mxu0 0.0
            %1049 = vmatprep.subr.mxu0 0.0
            %1050 = vmatpush1.xpose.msra.mxu0 0.0
            %1051 = vmatprep.subr.mxu0 0.0
            %1052 = vmatpush1.xpose.msra.mxu0 0.0
            %1053 = vmatprep.subr.mxu0 0.0
            %1054 = vmatpush1.xpose.msra.mxu0 0.0
            %1055 = vmatprep.subr.mxu0 0.0
            %1056 = vmatpush1.xpose.msra.mxu0 0.0
            %1057 = vmatprep.subr.mxu0 0.0
            %1058 = vmatpush1.xpose.msra.mxu0 0.0
            %1059 = vmatprep.subr.mxu0 0.0
            %1060 = vmatpush1.xpose.msra.mxu0 %v1033
            %1061 = vmatprep.subr.mxu0 0.0
            %1062 = vmatpush1.xpose.msra.mxu0 %v1030
            %1063 = vmatprep.subr.mxu0 0.0
            %1064 = vmatpush1.xpose.msra.mxu0 %v1027
            %1065 = vmatprep.subr.mxu0 0.0
            %1066 = vmatpush1.xpose.msra.mxu0 %v1024
            %1067 = vmatprep.subr.mxu0 0.0
            %1068 = vmatpush2.xpose.msra.mxu0 0.0
            %1069 = vmatprep.subr.mxu0 0.0
            %1070 = vmatpush2.xpose.msra.mxu0 0.0
            %1071 = vmatprep.subr.mxu0 0.0
            %1072 = vmatpush2.xpose.msra.mxu0 0.0
            %1073 = vmatprep.subr.mxu0 0.0
            %1074 = vmatpush2.xpose.msra.mxu0 0.0
            %1075 = vmatprep.subr.mxu0 0.0
            %1076 = vmatpush2.xpose.msra.mxu0 0.0
            %1077 = vmatprep.subr.mxu0 0.0
            %1078 = vmatpush2.xpose.msra.mxu0 0.0
            %1079 = vmatprep.subr.mxu0 0.0
            %1080 = vmatpush2.xpose.msra.mxu0 0.0
            %1081 = vmatprep.subr.mxu0 0.0
            %1082 = vmatpush2.xpose.msra.mxu0 0.0
            %1083 = vmatprep.subr.mxu0 0.0
            %1084 = vmatpush2.xpose.msra.mxu0 0.0
            %1085 = vmatprep.subr.mxu0 0.0
            %1086 = vmatpush2.xpose.msra.mxu0 0.0
            %1087 = vmatprep.subr.mxu0 0.0
            %1088 = vmatpush2.xpose.msra.mxu0 0.0
            %1089 = vmatprep.subr.mxu0 0.0
            %1090 = vmatpush2.xpose.msra.mxu0 0.0
            %1091 = vmatprep.subr.mxu0 0.0
            %1092 = vmatpush2.xpose.msra.mxu0 0.0
            %1093 = vmatprep.subr.mxu0 0.0
            %1094 = vmatpush2.xpose.msra.mxu0 0.0
            %1095 = vmatprep.subr.mxu0 0.0
            %1096 = vmatpush2.xpose.msra.mxu0 0.0
            %1097 = vmatprep.subr.mxu0 0.0
            %1098 = vmatpush2.xpose.msra.mxu0 0.0
            %1099 = vmatprep.mubr.f32.mxu0 0.0
            %1100 = vmatmul.mubr.f32.gmra.mxu0 %v1012
            %v1101 = vpop.f32.mrf.mxu0
            %v1102 = vadd.f32 0.0, %v1101
            %v1103 = vpop.f32.mrf.mxu0
            %1104 = vmatprep.mubr.f32.mxu0 0.0
            %1105 = vmatmul.mubr.f32.gmra.mxu0 %v1015
            %v1106 = vpop.f32.mrf.mxu0
            %v1107 = vadd.f32 0.0, %v1106
            %v1108 = vpop.f32.mrf.mxu0
            %1109 = vmatprep.mubr.f32.mxu0 0.0
            %1110 = vmatmul.mubr.f32.gmra.mxu0 %v1018
            %v1111 = vpop.f32.mrf.mxu0
            %v1112 = vadd.f32 0.0, %v1111
            %v1113 = vpop.f32.mrf.mxu0
            %1114 = vmatprep.mubr.f32.mxu0 0.0
            %1115 = vmatmul.mubr.f32.gmra.mxu0 %v1021
            %v1116 = vpop.f32.mrf.mxu0
            %v1117 = vadd.f32 0.0, %v1116
            %v1118 = vpop.f32.mrf.mxu0
            %1119 = vdwg.mxu0
            %v1120 = vld [vmem:[#allocation14] sm:$0xff]
            %v1121 = vld [vmem:[#allocation14 + $0x8] sm:$0xff]
            %v1122 = vld [vmem:[#allocation14 + $0x10] sm:$0xff]
            %v1123 = vld [vmem:[#allocation14 + $0x18] sm:$0xff]
            %v1125 = vsel %vm962, %v1102, 0
            %v1128 = vsel %vm962, %v1107, 0
            %v1131 = vsel %vm962, %v1112, 0
            %v1134 = vsel %vm962, %v1117, 0
            %1136 = vmatprep.subr.mxu0 0.0
            %1137 = vmatpush1.msra.mxu0 0.0
            %1138 = vmatprep.subr.mxu0 0.0
            %1139 = vmatpush1.msra.mxu0 0.0
            %1140 = vmatprep.subr.mxu0 0.0
            %1141 = vmatpush1.msra.mxu0 0.0
            %1142 = vmatprep.subr.mxu0 0.0
            %1143 = vmatpush1.msra.mxu0 0.0
            %1144 = vmatprep.subr.mxu0 0.0
            %1145 = vmatpush1.msra.mxu0 0.0
            %1146 = vmatprep.subr.mxu0 0.0
            %1147 = vmatpush1.msra.mxu0 0.0
            %1148 = vmatprep.subr.mxu0 0.0
            %1149 = vmatpush1.msra.mxu0 0.0
            %1150 = vmatprep.subr.mxu0 0.0
            %1151 = vmatpush1.msra.mxu0 0.0
            %1152 = vmatprep.subr.mxu0 0.0
            %1153 = vmatpush1.msra.mxu0 0.0
            %1154 = vmatprep.subr.mxu0 0.0
            %1155 = vmatpush1.msra.mxu0 0.0
            %1156 = vmatprep.subr.mxu0 0.0
            %1157 = vmatpush1.msra.mxu0 0.0
            %1158 = vmatprep.subr.mxu0 0.0
            %1159 = vmatpush1.msra.mxu0 0.0
            %1160 = vmatprep.subr.mxu0 0.0
            %1161 = vmatpush1.msra.mxu0 %v1123
            %1162 = vmatprep.subr.mxu0 0.0
            %1163 = vmatpush1.msra.mxu0 %v1122
            %1164 = vmatprep.subr.mxu0 0.0
            %1165 = vmatpush1.msra.mxu0 %v1121
            %1166 = vmatprep.subr.mxu0 0.0
            %1167 = vmatpush1.msra.mxu0 %v1120
            %1168 = vmatprep.subr.mxu0 0.0
            %1169 = vmatpush2.msra.mxu0 0.0
            %1170 = vmatprep.subr.mxu0 0.0
            %1171 = vmatpush2.msra.mxu0 0.0
            %1172 = vmatprep.subr.mxu0 0.0
            %1173 = vmatpush2.msra.mxu0 0.0
            %1174 = vmatprep.subr.mxu0 0.0
            %1175 = vmatpush2.msra.mxu0 0.0
            %1176 = vmatprep.subr.mxu0 0.0
            %1177 = vmatpush2.msra.mxu0 0.0
            %1178 = vmatprep.subr.mxu0 0.0
            %1179 = vmatpush2.msra.mxu0 0.0
            %1180 = vmatprep.subr.mxu0 0.0
            %1181 = vmatpush2.msra.mxu0 0.0
            %1182 = vmatprep.subr.mxu0 0.0
            %1183 = vmatpush2.msra.mxu0 0.0
            %1184 = vmatprep.subr.mxu0 0.0
            %1185 = vmatpush2.msra.mxu0 0.0
            %1186 = vmatprep.subr.mxu0 0.0
            %1187 = vmatpush2.msra.mxu0 0.0
            %1188 = vmatprep.subr.mxu0 0.0
            %1189 = vmatpush2.msra.mxu0 0.0
            %1190 = vmatprep.subr.mxu0 0.0
            %1191 = vmatpush2.msra.mxu0 0.0
            %1192 = vmatprep.subr.mxu0 0.0
            %1193 = vmatpush2.msra.mxu0 0.0
            %1194 = vmatprep.subr.mxu0 0.0
            %1195 = vmatpush2.msra.mxu0 0.0
            %1196 = vmatprep.subr.mxu0 0.0
            %1197 = vmatpush2.msra.mxu0 0.0
            %1198 = vmatprep.subr.mxu0 0.0
            %1199 = vmatpush2.msra.mxu0 0.0
            %1200 = vmatprep.mubr.f32.mxu0 0.0
            %1201 = vmatmul.mubr.f32.gmra.mxu0 %v1125
            %v1202 = vpop.f32.mrf.mxu0
            %v1203 = vadd.f32 0.0, %v1202
            %v1204 = vpop.f32.mrf.mxu0
            %1205 = vmatprep.mubr.f32.mxu0 0.0
            %1206 = vmatmul.mubr.f32.gmra.mxu0 %v1128
            %v1207 = vpop.f32.mrf.mxu0
            %v1208 = vadd.f32 0.0, %v1207
            %v1209 = vpop.f32.mrf.mxu0
            %1210 = vmatprep.mubr.f32.mxu0 0.0
            %1211 = vmatmul.mubr.f32.gmra.mxu0 %v1131
            %v1212 = vpop.f32.mrf.mxu0
            %v1213 = vadd.f32 0.0, %v1212
            %v1214 = vpop.f32.mrf.mxu0
            %1215 = vmatprep.mubr.f32.mxu0 0.0
            %1216 = vmatmul.mubr.f32.gmra.mxu0 %v1134
            %v1217 = vpop.f32.mrf.mxu0
            %v1218 = vadd.f32 0.0, %v1217
            %v1219 = vpop.f32.mrf.mxu0
            %1220 = vdwg.mxu0
            %1221 = vst.msk [vmem:[#allocation5] sm:$0xff] %vm962, %v1203
            %1222 = vst.msk [vmem:[#allocation5 + $0x8] sm:$0xff] %vm962, %v1208
            %1223 = vst.msk [vmem:[#allocation5 + $0x10] sm:$0xff] %vm962, %v1213
            %1224 = vst.msk [vmem:[#allocation5 + $0x18] sm:$0xff] %vm962, %v1218
          $region92: #{tpu_custom_call.1} parent=87 // pred_fallthru
            _
          %v1225 = vld [vmem:[%s5] sm:$0x1]
          %v1226 = vld [vmem:[%s367] sm:$0xff]
          %v1227 = vld [vmem:[#allocation5] sm:$0xff]
          %v1228 = vld [vmem:[#allocation5 + $0x8] sm:$0xff]
          %v1229 = vld [vmem:[#allocation5 + $0x10] sm:$0xff]
          %v1230 = vld [vmem:[#allocation5 + $0x18] sm:$0xff]
          %v1232 = vlaneseq
          %v1233 = vshrl.u32 %v1232, 7
          %v1234 = vsub.s32 0, %v1233
          %v1235 = vrot.slane %v1225, %v1234
          %vm1237 = vcmask 261120
          %v1239 = vsel %vm1237, %v1226, 0
          %1241 = vmatprep.subr.mxu0 0.0
          %1242 = vmatpush1.msra.mxu0 0.0
          %1243 = vmatprep.subr.mxu0 0.0
          %1244 = vmatpush1.msra.mxu0 0.0
          %1245 = vmatprep.subr.mxu0 0.0
          %1246 = vmatpush1.msra.mxu0 0.0
          %1247 = vmatprep.subr.mxu0 0.0
          %1248 = vmatpush1.msra.mxu0 0.0
          %1249 = vmatprep.subr.mxu0 0.0
          %1250 = vmatpush1.msra.mxu0 0.0
          %1251 = vmatprep.subr.mxu0 0.0
          %1252 = vmatpush1.msra.mxu0 0.0
          %1253 = vmatprep.subr.mxu0 0.0
          %1254 = vmatpush1.msra.mxu0 0.0
          %1255 = vmatprep.subr.mxu0 0.0
          %1256 = vmatpush1.msra.mxu0 0.0
          %1257 = vmatprep.subr.mxu0 0.0
          %1258 = vmatpush1.msra.mxu0 0.0
          %1259 = vmatprep.subr.mxu0 0.0
          %1260 = vmatpush1.msra.mxu0 0.0
          %1261 = vmatprep.subr.mxu0 0.0
          %1262 = vmatpush1.msra.mxu0 0.0
          %1263 = vmatprep.subr.mxu0 0.0
          %1264 = vmatpush1.msra.mxu0 0.0
          %1265 = vmatprep.subr.mxu0 0.0
          %1266 = vmatpush1.msra.mxu0 %v1230
          %1267 = vmatprep.subr.mxu0 0.0
          %1268 = vmatpush1.msra.mxu0 %v1229
          %1269 = vmatprep.subr.mxu0 0.0
          %1270 = vmatpush1.msra.mxu0 %v1228
          %1271 = vmatprep.subr.mxu0 0.0
          %1272 = vmatpush1.msra.mxu0 %v1227
          %1273 = vmatprep.subr.mxu0 0.0
          %1274 = vmatpush2.msra.mxu0 0.0
          %1275 = vmatprep.subr.mxu0 0.0
          %1276 = vmatpush2.msra.mxu0 0.0
          %1277 = vmatprep.subr.mxu0 0.0
          %1278 = vmatpush2.msra.mxu0 0.0
          %1279 = vmatprep.subr.mxu0 0.0
          %1280 = vmatpush2.msra.mxu0 0.0
          %1281 = vmatprep.subr.mxu0 0.0
          %1282 = vmatpush2.msra.mxu0 0.0
          %1283 = vmatprep.subr.mxu0 0.0
          %1284 = vmatpush2.msra.mxu0 0.0
          %1285 = vmatprep.subr.mxu0 0.0
          %1286 = vmatpush2.msra.mxu0 0.0
          %1287 = vmatprep.subr.mxu0 0.0
          %1288 = vmatpush2.msra.mxu0 0.0
          %1289 = vmatprep.subr.mxu0 0.0
          %1290 = vmatpush2.msra.mxu0 0.0
          %1291 = vmatprep.subr.mxu0 0.0
          %1292 = vmatpush2.msra.mxu0 0.0
          %1293 = vmatprep.subr.mxu0 0.0
          %1294 = vmatpush2.msra.mxu0 0.0
          %1295 = vmatprep.subr.mxu0 0.0
          %1296 = vmatpush2.msra.mxu0 0.0
          %1297 = vmatprep.subr.mxu0 0.0
          %1298 = vmatpush2.msra.mxu0 0.0
          %1299 = vmatprep.subr.mxu0 0.0
          %1300 = vmatpush2.msra.mxu0 0.0
          %1301 = vmatprep.subr.mxu0 0.0
          %1302 = vmatpush2.msra.mxu0 0.0
          %1303 = vmatprep.subr.mxu0 0.0
          %1304 = vmatpush2.msra.mxu0 0.0
          %1305 = vmatprep.mubr.f32.mxu0 0.0
          %1306 = vmatmul.mubr.f32.gmra.mxu0 %v1239
          %v1307 = vpop.f32.mrf.mxu0
          %v1308 = vadd.f32 %v1235, %v1307
          %v1309 = vpop.f32.mrf.mxu0
          %1310 = vdwg.mxu0
          %1311 = vst.msk [vmem:[%s419] sm:$0xff] %vm1237, %v1308
        $region88: #{tpu_custom_call.1} parent=51 // pred_fallthru
          _
        %s1312 = sand.u32 %s234, 1
        %s1313 = scalar_lea.sflag [#allocation8], %s1312
        %s1314 = sand.u32 %s234, 1
        %s1315 = smul.addr %s1314, 8
        %s1316 = scalar_lea.vmem [#allocation17], %s1315
        // Predicated region
        $region93: #{tpu_custom_call.1} parent=51 // pred_check
          %p1317 = pneg %p244
        $region94: #{tpu_custom_call.1} parent=51 // pred_check_branch
          %1319 = sbr.rel (%p1317) target = $region96
        $region95: #{tpu_custom_call.1} parent=51 // pred_region
          %s1320 = smul.u32 %s34, %s35
          %s1322 = ssub.s32 128, 128
          %1323 = vsyncadd %s1313, %s1322
          %s1324 = sadd.s32 %s1320, %s33
          %s1325 = smul.addr %s1324, 128
          %s1326 = scalar_lea.hbm %s8, %s1325
          %s1328 = sshll.u32 %s1316, 4
          %s1329 = int_to_ptr.vmem [resolvable:$true] %s1328
          %1331 = dma.vmem_to_hbm [thread:$0]  %s1329, 128, %s1326, %s1313
        $region96: #{tpu_custom_call.1} parent=51 // pred_fallthru
          _
      $region52: #{tpu_custom_call.1} parent=5 // pred_fallthru
        _
      %p1332 = scmp.le.s32.totalorder 2, %s23
      // Predicated region
      $region97: #{tpu_custom_call.1} parent=5 // pred_check
        %p1333 = pneg %p1332
      $region98: #{tpu_custom_call.1} parent=5 // pred_check_branch
        %1335 = sbr.rel (%p1333) target = $region100
      $region99: #{tpu_custom_call.1} parent=5 // pred_region
        %s1336 = ssub.s32 %s23, 2
        // Predicated region
        $region101: #{tpu_custom_call.1} parent=99 // pred_check
          %p1337 = pneg %p250
        $region102: #{tpu_custom_call.1} parent=99 // pred_check_branch
          %1339 = sbr.rel (%p1337) target = $region104
        $region103: #{tpu_custom_call.1} parent=99 // pred_region
          %s1340 = sand.u32 %s235, 1
          %s1341 = scalar_lea.sflag [#allocation8], %s1340
          %s1342 = sand.u32 %s235, 1
          %s1343 = smul.addr %s1342, 8
          %s1344 = scalar_lea.vmem [#allocation17], %s1343
          %1345 = dma.done %s1341, 128
        $region104: #{tpu_custom_call.1} parent=99 // pred_fallthru
          _
      $region100: #{tpu_custom_call.1} parent=5 // pred_fallthru
        _
    $region6: #{tpu_custom_call.1} parent=1 // loop_footer
      %s27 = sadd.s32 1, %s23
    $region7: #{tpu_custom_call.1} parent=1 // loop_footer_branch
      %22 = sbr.rel target = $region3
    $region8: #{tpu_custom_call.1} parent=1 // loop_exit
      _
    %1346 = vsyncpa [#allocation7], 1
    %s1347 = scalar_lea.sflag [#allocation7], 1
    %1348 = vsyncpa %s1347, 1
    %1349 = vsyncpa [#allocation10], 1
    %1350 = vsyncpa [#allocation13], 1
    %1351 = vsyncpa [#allocation16], 1
    %1352 = vsyncpa [#allocation8], 1
    %s1353 = scalar_lea.sflag [#allocation8], 1
    %1354 = vsyncpa %s1353, 1

</llo_original>
